<compile_context>
chip_gen: v5e
topology: v5e:2x2
jax: 0.10.0
libtpu: 0.0.40
codegen_flags: <defaults>
</compile_context>

<pallas_src>
import functools
import math

import numpy as np
import jax
import jax.numpy as jnp
from jax.experimental import pallas as pl
from jax.experimental.pallas import tpu as pltpu


_WEIGHT_ORDER = ('ln1_g', 'ln1_b', 'wqkv', 'bqkv', 'wo', 'bo',
                 'ln2_g', 'ln2_b', 'w1', 'b1', 'w2', 'b2',
                 'wd1', 'bd1', 'wd2', 'bd2', 'remb_aug')


# ----------------------------------------------------------------------------
# Fused Pallas kernel (per batch element): pre-LN encoder layer + decoder FFN
# + packed [xout | rule-table logits] output matmul.
# ----------------------------------------------------------------------------
def fused_design_kernel(x_ref, kbias_ref,
                        ln1g_ref, ln1b_ref,
                        wqkv_ref, bqkv_ref, wo_ref, bo_ref,
                        ln2g_ref, ln2b_ref,
                        w1_ref, b1_ref, w2_ref, b2_ref,
                        wd1_ref, bd1_ref, wd2_ref, bd2_ref,
                        remb_aug_ref,
                        out_ref, *, nheads):
    x = x_ref[0]                                   # (S, D) f32, one batch element
    S, D = x.shape
    dh = D // nheads
    scale = 1.0 / math.sqrt(dh)
    cdt = wqkv_ref.dtype                           # MXU operand dtype (bf16)

    def layer_norm(v, g, b):
        mu = jnp.mean(v, axis=-1, keepdims=True)
        var = jnp.mean((v - mu) ** 2, axis=-1, keepdims=True)
        return (v - mu) * jax.lax.rsqrt(var + 1e-5) * g + b

    # --- pre-LN multi-head self-attention -------------------------------------
    xn = layer_norm(x, ln1g_ref[...], ln1b_ref[...])
    # one lane-dense QKV matmul (no per-head weight tensors, no H-fold xn copy)
    qkv = jnp.dot(xn.astype(cdt), wqkv_ref[...],
                  preferred_element_type=jnp.float32) + bqkv_ref[...]   # (S, 3D)
    q = qkv[:, :D] * scale                          # fold 1/sqrt(dh) into q
    k = qkv[:, D:2 * D]
    v = qkv[:, 2 * D:]

    def split_heads(t):                             # (S, D) -> (H, S, dh)
        return jnp.concatenate(
            [t[None, :, h * dh:(h + 1) * dh] for h in range(nheads)], axis=0)

    qh = split_heads(q).astype(cdt)
    kh = split_heads(k).astype(cdt)
    vh = split_heads(v).astype(cdt)

    # per-batch scores; key-padding bias built from the tiny (1, S) mask bias
    s = jnp.einsum('hqc,hkc->hqk', qh, kh,
                   preferred_element_type=jnp.float32)                  # (H, S, S)
    s = s + kbias_ref[0]                            # (1, S) broadcast over keys
    m = jnp.max(s, axis=-1, keepdims=True)
    p = jnp.exp(s - m)                              # f32 elementwise (EUP)
    denom = jnp.sum(p, axis=-1, keepdims=True)
    p = p * pl.reciprocal(denom, approx=True)       # EUP slot, frees the VPU
    attn = jnp.einsum('hqk,hkc->hqc', p.astype(cdt), vh,
                      preferred_element_type=jnp.float32)               # (H, S, dh)

    # concat heads back to a lane-dense (S, D) tile -> single MXU out-projection
    attn_cat = jnp.concatenate([attn[h] for h in range(nheads)], axis=-1)
    x = x + jnp.dot(attn_cat.astype(cdt), wo_ref[...],
                    preferred_element_type=jnp.float32) + bo_ref[...]

    # --- pre-LN feed-forward block (D -> 2D -> D, ReLU) ------------------------
    xn = layer_norm(x, ln2g_ref[...], ln2b_ref[...])
    h1 = jnp.maximum(jnp.dot(xn.astype(cdt), w1_ref[...],
                             preferred_element_type=jnp.float32) + b1_ref[...], 0.0)
    x = x + jnp.dot(h1.astype(cdt), w2_ref[...],
                    preferred_element_type=jnp.float32) + b2_ref[...]

    # --- decoder FeedForwardNet: Linear -> ReLU -> Linear (activate_last=False) -
    hd = jnp.maximum(jnp.dot(x.astype(cdt), wd1_ref[...],
                             preferred_element_type=jnp.float32) + bd1_ref[...], 0.0)
    xout = jnp.dot(hd.astype(cdt), wd2_ref[...],
                   preferred_element_type=jnp.float32) + bd2_ref[...]   # (S, D) f32

    # --- packed lane-dense output slab: [xout | rule logits | zero pad] --------
    # remb_aug = [I_D | rule_emb^T | 0] padded to a multiple of 128 lanes, so one
    # MXU matmul produces the whole (S, Wout) row and the store is unmasked.
    out_ref[0] = jnp.dot(xout.astype(cdt), remb_aug_ref[...],
                         preferred_element_type=jnp.float32)            # (S, Wout)


# ----------------------------------------------------------------------------
# One-time parameter preparation (hoisted off the per-forward path)
# ----------------------------------------------------------------------------
def prepare_kernel_params(params, rule_emb, mxu_dtype=jnp.bfloat16):
    """Cast MXU-facing weights once and build the augmented, lane-padded rule table."""
    D = params['wqkv'].shape[0]
    nrules = rule_emb.shape[0]
    wout = ((D + nrules + 127) // 128) * 128
    remb_aug = jnp.concatenate(
        [jnp.eye(D, dtype=jnp.float32),
         rule_emb.T.astype(jnp.float32),
         jnp.zeros((D, wout - D - nrules), jnp.float32)], axis=1)       # (D, Wout)

    f32 = lambda a: a.astype(jnp.float32)
    mxu = lambda a: a.astype(mxu_dtype)
    return {
        'ln1_g': f32(params['ln1_g']), 'ln1_b': f32(params['ln1_b']),
        'wqkv': mxu(params['wqkv']), 'bqkv': f32(params['bqkv']),
        'wo': mxu(params['wo']), 'bo': f32(params['bo']),
        'ln2_g': f32(params['ln2_g']), 'ln2_b': f32(params['ln2_b']),
        'w1': mxu(params['w1']), 'b1': f32(params['b1']),
        'w2': mxu(params['w2']), 'b2': f32(params['b2']),
        'wd1': mxu(params['wd1']), 'bd1': f32(params['bd1']),
        'wd2': mxu(params['wd2']), 'bd2': f32(params['bd2']),
        'remb_aug': mxu(remb_aug),
    }


# ----------------------------------------------------------------------------
# Wrapper: batch-parallel grid, resident weights, lane-dense packed output
# ----------------------------------------------------------------------------
def run_design_transformer_core(emb, key_bias, kp, *, nheads):
    B, S, D = emb.shape
    wout = kp['remb_aug'].shape[1]
    weights = [kp[name] for name in _WEIGHT_ORDER]

    def batch_spec(arr):
        nd = arr.ndim
        return pl.BlockSpec((1,) + arr.shape[1:],
                            lambda b: (b,) + (0,) * (nd - 1))

    def resident_spec(arr):
        nd = arr.ndim
        return pl.BlockSpec(arr.shape, lambda b: (0,) * nd)

    in_specs = ([batch_spec(emb), batch_spec(key_bias)]
                + [resident_spec(w) for w in weights])
    out_specs = pl.BlockSpec((1, S, wout), lambda b: (b, 0, 0))
    out_shape = jax.ShapeDtypeStruct((B, S, wout), jnp.float32)

    dh = D // nheads
    flops = B * (2 * S * D * 3 * D                   # fused QKV
                 + 2 * 2 * nheads * S * S * dh       # QK^T + PV
                 + 2 * S * D * D                     # out projection
                 + 2 * 2 * S * D * 2 * D             # encoder FFN
                 + 2 * 2 * S * D * 2 * D             # decoder FFN
                 + 2 * S * D * wout)                 # [xout | rule logits]
    transcendentals = B * (nheads * S * S + nheads * S + 2 * S)
    weight_bytes = sum(int(np.prod(w.shape)) * w.dtype.itemsize for w in weights)
    bytes_accessed = int(emb.size * emb.dtype.itemsize
                         + key_bias.size * key_bias.dtype.itemsize
                         + B * S * wout * 4 + weight_bytes)

    # scoped VMEM sized to the (tiny) per-step footprint, with a generous floor
    block_bytes = int(S * D * 4 + S * 4 + S * wout * 4 + weight_bytes)
    vmem_limit = int(min(32 << 20, max(16 << 20, 8 * block_bytes)))

    return pl.pallas_call(
        functools.partial(fused_design_kernel, nheads=nheads),
        grid=(B,),
        in_specs=in_specs,
        out_specs=out_specs,
        out_shape=out_shape,
        compiler_params=pltpu.CompilerParams(
            dimension_semantics=("parallel",),     # feeds both TCs on v7x
            vmem_limit_bytes=vmem_limit),
        cost_estimate=pl.CostEstimate(flops=flops,
                                      transcendentals=transcendentals,
                                      bytes_accessed=bytes_accessed),
    )(emb, key_bias, *weights)


# ----------------------------------------------------------------------------
# Plain-JAX glue (DesignEmbeddings PE/lookup, GrammarRuleMapper table gathers)
# ----------------------------------------------------------------------------
def sinusoidal_pe(max_seq_len, dmodel):
    position = np.arange(max_seq_len)[:, None].astype(np.float32)
    div_term = np.exp(np.arange(0, dmodel, 2).astype(np.float32)
                      * (-math.log(10000.0) / dmodel))
    pe = np.zeros((max_seq_len, dmodel), dtype=np.float32)
    pe[:, 0::2] = np.sin(position * div_term)
    pe[:, 1::2] = np.cos(position * div_term)
    return jnp.asarray(pe)


def design_transformer_forward(x, kp, tables, *, nheads):
    nodes, edges = x['nodes'], x['edges']
    B, n_nodes = nodes.shape
    n_edges = edges.shape[1]
    S = n_nodes + n_edges
    D = tables['tok_emb'].shape[1]
    nrules = tables['rule_emb'].shape[0]

    # DesignEmbeddings
    pe = tables['pe']
    node_pe = jnp.broadcast_to(pe[:n_nodes], (B, n_nodes, D))
    edge_pe = pe[x['children']] + pe[x['parents']]
    pe_full = jnp.concatenate([node_pe, edge_pe], axis=1)
    symbols = jnp.concatenate([nodes, edges], axis=-1)
    emb = (tables['tok_emb'][symbols] + pe_full).astype(jnp.float32)   # (B, S, D)

    # per-batch additive key-padding bias, O(B*S); no (B*S)^2 tensor anywhere
    mask = jnp.concatenate([x['node_mask'], x['edge_mask']], axis=1)   # (B, S) bool
    key_bias = jnp.where(mask, 0.0, -1e30).astype(jnp.float32)[:, None, :]  # (B,1,S)

    slab = run_design_transformer_core(emb, key_bias, kp, nheads=nheads)  # (B,S,Wout)
    xout = slab[..., :D]
    logits_full = slab[..., D:D + nrules]

    # GrammarRuleMapper: gather per-symbol rule logits from the full-table logits
    rule_ids = tables['rule_mapping'][symbols]                          # (B, S, R)
    rmask = jnp.where(mask[..., None], tables['rule_mask'][symbols], -jnp.inf)
    logits = jnp.take_along_axis(logits_full, rule_ids, axis=-1) + rmask

    # ExpansionRuleDist flattens logits/rule_ids over (seq, rules_per_symbol).
    # TODO(synk): categorical sample()/mode() of ExpansionRuleDist (python-loop
    # rule decoding) is host-side logic, not a Pallas kernel.
    return logits.reshape(B, -1), rule_ids.reshape(B, -1), xout


# ----------------------------------------------------------------------------
# Pure-JAX reference for verification
# ----------------------------------------------------------------------------
def reference_encoder_decoder(emb, mask, p, nheads):
    B, S, D = emb.shape
    dh = D // nheads
    kb = jnp.where(mask, 0.0, -1e30)[:, None, None, :]        # (B,1,1,S)

    def ln(v, g, b):
        mu = jnp.mean(v, -1, keepdims=True)
        var = jnp.mean((v - mu) ** 2, -1, keepdims=True)
        return (v - mu) * jax.lax.rsqrt(var + 1e-5) * g + b

    x = emb
    xn = ln(x, p['ln1_g'], p['ln1_b'])
    qkv = xn @ p['wqkv'] + p['bqkv']
    q = qkv[..., :D].reshape(B, S, nheads, dh).transpose(0, 2, 1, 3)
    k = qkv[..., D:2 * D].reshape(B, S, nheads, dh).transpose(0, 2, 1, 3)
    v = qkv[..., 2 * D:].reshape(B, S, nheads, dh).transpose(0, 2, 1, 3)
    s = (q @ k.transpose(0, 1, 3, 2)) / math.sqrt(dh) + kb
    attn = jax.nn.softmax(s, axis=-1) @ v
    attn = attn.transpose(0, 2, 1, 3).reshape(B, S, D)
    x = x + attn @ p['wo'] + p['bo']
    xn = ln(x, p['ln2_g'], p['ln2_b'])
    x = x + jnp.maximum(xn @ p['w1'] + p['b1'], 0.0) @ p['w2'] + p['b2']
    hd = jnp.maximum(x @ p['wd1'] + p['bd1'], 0.0)
    return hd @ p['wd2'] + p['bd2']


# ----------------------------------------------------------------------------
# Main
# ----------------------------------------------------------------------------
if __name__ == "__main__":
    # small shapes consistent with the module
    B, n_nodes, n_edges = 2, 6, 2
    D, H = 32, 4
    nsymbols, nrules = 5, 9
    max_rules_per_symbol = 3
    S = n_nodes + n_edges

    key = jax.random.PRNGKey(0)
    ks = jax.random.split(key, 24)

    def w(k, shape, scale=0.05):
        return jax.random.normal(k, shape, jnp.float32) * scale

    params = {
        'ln1_g': jnp.ones((1, D), jnp.float32), 'ln1_b': jnp.zeros((1, D), jnp.float32),
        'wqkv': w(ks[0], (D, 3 * D)), 'bqkv': w(ks[1], (1, 3 * D)),
        'wo': w(ks[2], (D, D)), 'bo': w(ks[3], (1, D)),
        'ln2_g': jnp.ones((1, D), jnp.float32), 'ln2_b': jnp.zeros((1, D), jnp.float32),
        'w1': w(ks[4], (D, 2 * D)), 'b1': w(ks[5], (1, 2 * D)),
        'w2': w(ks[6], (2 * D, D)), 'b2': w(ks[7], (1, D)),
        'wd1': w(ks[8], (D, 2 * D)), 'bd1': w(ks[9], (1, 2 * D)),
        'wd2': w(ks[10], (2 * D, D)), 'bd2': w(ks[11], (1, D)),
    }

    # synthetic deterministic grammar tables (GrammarRuleMapper buffers)
    rule_mapping_np = np.zeros((nsymbols + 1, max_rules_per_symbol), dtype=np.int32)
    rule_mask_np = np.zeros((nsymbols + 1, max_rules_per_symbol), dtype=np.float32)
    for sym in range(1, nsymbols + 1):
        cnt = 1 + (sym % max_rules_per_symbol)
        ids = [(sym * 2 + j) % nrules for j in range(cnt)]
        rule_mapping_np[sym, :cnt] = ids
        rule_mask_np[sym, cnt:] = -np.inf

    tables = {
        'pe': sinusoidal_pe(100, D),
        'tok_emb': w(ks[12], (nsymbols + 1, D), 0.1),
        # NOTE: the module inits rule embeddings to 0.0; we use small random
        # values so the matmul hot path is non-trivial.
        'rule_emb': w(ks[13], (nrules, D), 0.1),
        'rule_mapping': jnp.asarray(rule_mapping_np),
        'rule_mask': jnp.asarray(rule_mask_np),
    }

    # deterministic example observation
    x = {
        'nodes': jax.random.randint(ks[14], (B, n_nodes), 1, nsymbols + 1, jnp.int32),
        'edges': jax.random.randint(ks[15], (B, n_edges), 1, nsymbols + 1, jnp.int32),
        'parents': jax.random.randint(ks[16], (B, n_edges), 0, n_nodes, jnp.int32),
        'children': jax.random.randint(ks[17], (B, n_edges), 0, n_nodes, jnp.int32),
        'node_mask': jnp.ones((B, n_nodes), bool).at[1, n_nodes - 1].set(False),
        'edge_mask': jnp.ones((B, n_edges), bool),
    }

    # one-time weight prep: bf16 MXU operands + augmented lane-padded rule table
    kparams = prepare_kernel_params(params, tables['rule_emb'],
                                    mxu_dtype=jnp.bfloat16)

    logits, rule_ids, xout = design_transformer_forward(x, kparams, tables, nheads=H)
    jax.block_until_ready((logits, rule_ids, xout))

    # --- verification against pure-JAX f32 reference -----------------------
    pe = tables['pe']
    node_pe = jnp.broadcast_to(pe[:n_nodes], (B, n_nodes, D))
    edge_pe = pe[x['children']] + pe[x['parents']]
    symbols = jnp.concatenate([x['nodes'], x['edges']], axis=-1)
    emb_ref = tables['tok_emb'][symbols] + jnp.concatenate([node_pe, edge_pe], 1)
    mask = jnp.concatenate([x['node_mask'], x['edge_mask']], 1)
    xout_ref = reference_encoder_decoder(emb_ref, mask, params, H)
    rid_ref = tables['rule_mapping'][symbols]
    re_g = tables['rule_emb'][rid_ref]
    rm_ref = jnp.where(mask[..., None], tables['rule_mask'][symbols], -jnp.inf)
    logits_ref = (jnp.sum(xout_ref[:, :, None, :] * re_g, -1) + rm_ref).reshape(B, -1)

    # tolerance covers bf16 MXU operands + the approximate (EUP) softmax recip
    assert np.allclose(np.asarray(xout), np.asarray(xout_ref), rtol=3e-2, atol=3e-2)
    assert np.allclose(np.asarray(logits), np.asarray(logits_ref), rtol=3e-2, atol=3e-2)
    assert np.array_equal(np.asarray(rule_ids), np.asarray(rid_ref.reshape(B, -1)))

    print("KERNEL_OK")
</pallas_src>

<mosaic_0001>
module attributes {stable_mosaic.version = 11 : i64} {
  func.func @fused_design_kernel(%arg0: i32, %arg1: memref<1x8x32xf32, #tpu.memory_space<vmem>>, %arg2: memref<1x1x8xf32, #tpu.memory_space<vmem>>, %arg3: memref<1x32xf32, #tpu.memory_space<vmem>>, %arg4: memref<1x32xf32, #tpu.memory_space<vmem>>, %arg5: memref<32x96xbf16, #tpu.memory_space<vmem>>, %arg6: memref<1x96xf32, #tpu.memory_space<vmem>>, %arg7: memref<32x32xbf16, #tpu.memory_space<vmem>>, %arg8: memref<1x32xf32, #tpu.memory_space<vmem>>, %arg9: memref<1x32xf32, #tpu.memory_space<vmem>>, %arg10: memref<1x32xf32, #tpu.memory_space<vmem>>, %arg11: memref<32x64xbf16, #tpu.memory_space<vmem>>, %arg12: memref<1x64xf32, #tpu.memory_space<vmem>>, %arg13: memref<64x32xbf16, #tpu.memory_space<vmem>>, %arg14: memref<1x32xf32, #tpu.memory_space<vmem>>, %arg15: memref<32x64xbf16, #tpu.memory_space<vmem>>, %arg16: memref<1x64xf32, #tpu.memory_space<vmem>>, %arg17: memref<64x32xbf16, #tpu.memory_space<vmem>>, %arg18: memref<1x32xf32, #tpu.memory_space<vmem>>, %arg19: memref<32x128xbf16, #tpu.memory_space<vmem>>, %arg20: memref<1x8x128xf32, #tpu.memory_space<vmem>>) attributes {dimension_semantics = [#tpu.dimension_semantics<parallel>], iteration_bounds = array<i64: 2>, scalar_prefetch = 0 : i64, scratch_operands = 0 : i64, tpu.core_type = #tpu.core_type<tc>, window_params = [{transform_indices = @transform_0, window_bounds = array<i64: 1, 8, 32>}, {transform_indices = @transform_1, window_bounds = array<i64: 1, 1, 8>}, {pipeline_mode = #tpu.pipeline_mode<synchronous>, transform_indices = @transform_2, window_bounds = array<i64: 1, 32>}, {pipeline_mode = #tpu.pipeline_mode<synchronous>, transform_indices = @transform_3, window_bounds = array<i64: 1, 32>}, {pipeline_mode = #tpu.pipeline_mode<synchronous>, transform_indices = @transform_4, window_bounds = array<i64: 32, 96>}, {pipeline_mode = #tpu.pipeline_mode<synchronous>, transform_indices = @transform_5, window_bounds = array<i64: 1, 96>}, {pipeline_mode = #tpu.pipeline_mode<synchronous>, transform_indices = @transform_6, window_bounds = array<i64: 32, 32>}, {pipeline_mode = #tpu.pipeline_mode<synchronous>, transform_indices = @transform_7, window_bounds = array<i64: 1, 32>}, {pipeline_mode = #tpu.pipeline_mode<synchronous>, transform_indices = @transform_8, window_bounds = array<i64: 1, 32>}, {pipeline_mode = #tpu.pipeline_mode<synchronous>, transform_indices = @transform_9, window_bounds = array<i64: 1, 32>}, {pipeline_mode = #tpu.pipeline_mode<synchronous>, transform_indices = @transform_10, window_bounds = array<i64: 32, 64>}, {pipeline_mode = #tpu.pipeline_mode<synchronous>, transform_indices = @transform_11, window_bounds = array<i64: 1, 64>}, {pipeline_mode = #tpu.pipeline_mode<synchronous>, transform_indices = @transform_12, window_bounds = array<i64: 64, 32>}, {pipeline_mode = #tpu.pipeline_mode<synchronous>, transform_indices = @transform_13, window_bounds = array<i64: 1, 32>}, {pipeline_mode = #tpu.pipeline_mode<synchronous>, transform_indices = @transform_14, window_bounds = array<i64: 32, 64>}, {pipeline_mode = #tpu.pipeline_mode<synchronous>, transform_indices = @transform_15, window_bounds = array<i64: 1, 64>}, {pipeline_mode = #tpu.pipeline_mode<synchronous>, transform_indices = @transform_16, window_bounds = array<i64: 64, 32>}, {pipeline_mode = #tpu.pipeline_mode<synchronous>, transform_indices = @transform_17, window_bounds = array<i64: 1, 32>}, {pipeline_mode = #tpu.pipeline_mode<synchronous>, transform_indices = @transform_18, window_bounds = array<i64: 32, 128>}, {transform_indices = @transform_19, window_bounds = array<i64: 1, 8, 128>}]} {
    %c0 = arith.constant 0 : index
    %c0_0 = arith.constant 0 : index
    %c0_1 = arith.constant 0 : index
    %0 = vector.load %arg1[%c0, %c0_0, %c0_1] : memref<1x8x32xf32, #tpu.memory_space<vmem>>, vector<1x8x32xf32>
    %1 = vector.shape_cast %0 : vector<1x8x32xf32> to vector<8x32xf32>
    %c0_2 = arith.constant 0 : index
    %c0_3 = arith.constant 0 : index
    %2 = vector.load %arg3[%c0_2, %c0_3] : memref<1x32xf32, #tpu.memory_space<vmem>>, vector<1x32xf32>
    %c0_4 = arith.constant 0 : index
    %c0_5 = arith.constant 0 : index
    %3 = vector.load %arg4[%c0_4, %c0_5] : memref<1x32xf32, #tpu.memory_space<vmem>>, vector<1x32xf32>
    %cst = arith.constant dense<0.000000e+00> : vector<8xf32>
    %4 = vector.multi_reduction <add>, %1, %cst [1] : vector<8x32xf32> to vector<8xf32>
    %5 = vector.shape_cast %4 : vector<8xf32> to vector<8x1xf32>
    %cst_6 = arith.constant 3.200000e+01 : f32
    %6 = vector.broadcast %cst_6 : f32 to vector<8x1xf32>
    %7 = arith.divf %5, %6 : vector<8x1xf32>
    %8 = vector.broadcast %7 : vector<8x1xf32> to vector<8x32xf32>
    %9 = arith.subf %1, %8 : vector<8x32xf32>
    %10 = arith.mulf %9, %9 : vector<8x32xf32>
    %cst_7 = arith.constant dense<0.000000e+00> : vector<8xf32>
    %11 = vector.multi_reduction <add>, %10, %cst_7 [1] : vector<8x32xf32> to vector<8xf32>
    %12 = vector.shape_cast %11 : vector<8xf32> to vector<8x1xf32>
    %cst_8 = arith.constant 3.200000e+01 : f32
    %13 = vector.broadcast %cst_8 : f32 to vector<8x1xf32>
    %14 = arith.divf %12, %13 : vector<8x1xf32>
    %15 = vector.broadcast %7 : vector<8x1xf32> to vector<8x32xf32>
    %16 = arith.subf %1, %15 : vector<8x32xf32>
    %cst_9 = arith.constant 9.99999974E-6 : f32
    %17 = vector.broadcast %cst_9 : f32 to vector<8x1xf32>
    %18 = arith.addf %14, %17 : vector<8x1xf32>
    %19 = math.rsqrt %18 : vector<8x1xf32>
    %20 = vector.broadcast %19 : vector<8x1xf32> to vector<8x32xf32>
    %21 = arith.mulf %16, %20 : vector<8x32xf32>
    %22 = vector.broadcast %2 : vector<1x32xf32> to vector<8x32xf32>
    %23 = arith.mulf %21, %22 : vector<8x32xf32>
    %24 = vector.broadcast %3 : vector<1x32xf32> to vector<8x32xf32>
    %25 = arith.addf %23, %24 : vector<8x32xf32>
    %26 = arith.truncf %25 : vector<8x32xf32> to vector<8x32xbf16>
    %c0_10 = arith.constant 0 : index
    %c0_11 = arith.constant 0 : index
    %27 = vector.load %arg5[%c0_10, %c0_11] : memref<32x96xbf16, #tpu.memory_space<vmem>>, vector<32x96xbf16>
    %cst_12 = arith.constant dense<0.000000e+00> : vector<8x96xf32>
    %28 = tpu.matmul %26, %27, %cst_12 {dimension_numbers = #tpu.dot_dimension_numbers<[1], [0], [0], [1], [0, 0, 1, 1], [], []>} : vector<8x32xbf16>, vector<32x96xbf16>, vector<8x96xf32> -> vector<8x96xf32>
    %c0_13 = arith.constant 0 : index
    %c0_14 = arith.constant 0 : index
    %29 = vector.load %arg6[%c0_13, %c0_14] : memref<1x96xf32, #tpu.memory_space<vmem>>, vector<1x96xf32>
    %30 = vector.broadcast %29 : vector<1x96xf32> to vector<8x96xf32>
    %31 = arith.addf %28, %30 : vector<8x96xf32>
    %32 = vector.extract_strided_slice %31 {offsets = [0, 0], sizes = [8, 32], strides = [1, 1]} : vector<8x96xf32> to vector<8x32xf32>
    %cst_15 = arith.constant 0.353553385 : f32
    %33 = vector.broadcast %cst_15 : f32 to vector<8x32xf32>
    %34 = arith.mulf %32, %33 : vector<8x32xf32>
    %35 = vector.extract_strided_slice %31 {offsets = [0, 32], sizes = [8, 32], strides = [1, 1]} : vector<8x96xf32> to vector<8x32xf32>
    %36 = vector.extract_strided_slice %31 {offsets = [0, 64], sizes = [8, 32], strides = [1, 1]} : vector<8x96xf32> to vector<8x32xf32>
    %37 = vector.extract_strided_slice %34 {offsets = [0, 0], sizes = [8, 8], strides = [1, 1]} : vector<8x32xf32> to vector<8x8xf32>
    %38 = vector.shape_cast %37 : vector<8x8xf32> to vector<1x8x8xf32>
    %39 = vector.extract_strided_slice %34 {offsets = [0, 8], sizes = [8, 8], strides = [1, 1]} : vector<8x32xf32> to vector<8x8xf32>
    %40 = vector.shape_cast %39 : vector<8x8xf32> to vector<1x8x8xf32>
    %41 = vector.extract_strided_slice %34 {offsets = [0, 16], sizes = [8, 8], strides = [1, 1]} : vector<8x32xf32> to vector<8x8xf32>
    %42 = vector.shape_cast %41 : vector<8x8xf32> to vector<1x8x8xf32>
    %43 = vector.extract_strided_slice %34 {offsets = [0, 24], sizes = [8, 8], strides = [1, 1]} : vector<8x32xf32> to vector<8x8xf32>
    %44 = vector.shape_cast %43 : vector<8x8xf32> to vector<1x8x8xf32>
    %45 = tpu.concatenate %38, %40, %42, %44 in 0 : vector<1x8x8xf32>, vector<1x8x8xf32>, vector<1x8x8xf32>, vector<1x8x8xf32> -> vector<4x8x8xf32>
    %46 = arith.truncf %45 : vector<4x8x8xf32> to vector<4x8x8xbf16>
    %47 = vector.extract_strided_slice %35 {offsets = [0, 0], sizes = [8, 8], strides = [1, 1]} : vector<8x32xf32> to vector<8x8xf32>
    %48 = vector.shape_cast %47 : vector<8x8xf32> to vector<1x8x8xf32>
    %49 = vector.extract_strided_slice %35 {offsets = [0, 8], sizes = [8, 8], strides = [1, 1]} : vector<8x32xf32> to vector<8x8xf32>
    %50 = vector.shape_cast %49 : vector<8x8xf32> to vector<1x8x8xf32>
    %51 = vector.extract_strided_slice %35 {offsets = [0, 16], sizes = [8, 8], strides = [1, 1]} : vector<8x32xf32> to vector<8x8xf32>
    %52 = vector.shape_cast %51 : vector<8x8xf32> to vector<1x8x8xf32>
    %53 = vector.extract_strided_slice %35 {offsets = [0, 24], sizes = [8, 8], strides = [1, 1]} : vector<8x32xf32> to vector<8x8xf32>
    %54 = vector.shape_cast %53 : vector<8x8xf32> to vector<1x8x8xf32>
    %55 = tpu.concatenate %48, %50, %52, %54 in 0 : vector<1x8x8xf32>, vector<1x8x8xf32>, vector<1x8x8xf32>, vector<1x8x8xf32> -> vector<4x8x8xf32>
    %56 = arith.truncf %55 : vector<4x8x8xf32> to vector<4x8x8xbf16>
    %57 = vector.extract_strided_slice %36 {offsets = [0, 0], sizes = [8, 8], strides = [1, 1]} : vector<8x32xf32> to vector<8x8xf32>
    %58 = vector.shape_cast %57 : vector<8x8xf32> to vector<1x8x8xf32>
    %59 = vector.extract_strided_slice %36 {offsets = [0, 8], sizes = [8, 8], strides = [1, 1]} : vector<8x32xf32> to vector<8x8xf32>
    %60 = vector.shape_cast %59 : vector<8x8xf32> to vector<1x8x8xf32>
    %61 = vector.extract_strided_slice %36 {offsets = [0, 16], sizes = [8, 8], strides = [1, 1]} : vector<8x32xf32> to vector<8x8xf32>
    %62 = vector.shape_cast %61 : vector<8x8xf32> to vector<1x8x8xf32>
    %63 = vector.extract_strided_slice %36 {offsets = [0, 24], sizes = [8, 8], strides = [1, 1]} : vector<8x32xf32> to vector<8x8xf32>
    %64 = vector.shape_cast %63 : vector<8x8xf32> to vector<1x8x8xf32>
    %65 = tpu.concatenate %58, %60, %62, %64 in 0 : vector<1x8x8xf32>, vector<1x8x8xf32>, vector<1x8x8xf32>, vector<1x8x8xf32> -> vector<4x8x8xf32>
    %66 = arith.truncf %65 : vector<4x8x8xf32> to vector<4x8x8xbf16>
    "tpu.trace_start"() <{level = 10 : i32, message = "hqc,hkc->hqk"}> : () -> ()
    %cst_16 = arith.constant dense<0.000000e+00> : vector<4x8x8xf32>
    %67 = tpu.matmul %46, %56, %cst_16 {dimension_numbers = #tpu.dot_dimension_numbers<[2], [2], [1], [1], [0, 0, 0, 1, 1, 1], [0], [0]>} : vector<4x8x8xbf16>, vector<4x8x8xbf16>, vector<4x8x8xf32> -> vector<4x8x8xf32>
    "tpu.trace_stop"() : () -> ()
    %c0_17 = arith.constant 0 : index
    %c0_18 = arith.constant 0 : index
    %c0_19 = arith.constant 0 : index
    %68 = vector.load %arg2[%c0_17, %c0_18, %c0_19] : memref<1x1x8xf32, #tpu.memory_space<vmem>>, vector<1x1x8xf32>
    %69 = vector.shape_cast %68 : vector<1x1x8xf32> to vector<1x8xf32>
    %70 = vector.shape_cast %69 : vector<1x8xf32> to vector<1x1x8xf32>
    %71 = vector.broadcast %70 : vector<1x1x8xf32> to vector<4x8x8xf32>
    %72 = arith.addf %67, %71 : vector<4x8x8xf32>
    %cst_20 = arith.constant dense<0xFF800000> : vector<4x8xf32>
    %73 = vector.multi_reduction <maximumf>, %72, %cst_20 [2] : vector<4x8x8xf32> to vector<4x8xf32>
    %74 = vector.shape_cast %73 : vector<4x8xf32> to vector<4x8x1xf32>
    %75 = vector.broadcast %74 : vector<4x8x1xf32> to vector<4x8x8xf32>
    %76 = arith.subf %72, %75 : vector<4x8x8xf32>
    %77 = math.exp %76 : vector<4x8x8xf32>
    %cst_21 = arith.constant dense<0.000000e+00> : vector<4x8xf32>
    %78 = vector.multi_reduction <add>, %77, %cst_21 [2] : vector<4x8x8xf32> to vector<4x8xf32>
    %79 = vector.shape_cast %78 : vector<4x8xf32> to vector<4x8x1xf32>
    %80 = tpu.reciprocal %79 {approx = true} : vector<4x8x1xf32> -> vector<4x8x1xf32>
    %81 = vector.broadcast %80 : vector<4x8x1xf32> to vector<4x8x8xf32>
    %82 = arith.mulf %77, %81 : vector<4x8x8xf32>
    %83 = arith.truncf %82 : vector<4x8x8xf32> to vector<4x8x8xbf16>
    "tpu.trace_start"() <{level = 10 : i32, message = "hqk,hkc->hqc"}> : () -> ()
    %cst_22 = arith.constant dense<0.000000e+00> : vector<4x8x8xf32>
    %84 = tpu.matmul %83, %66, %cst_22 {dimension_numbers = #tpu.dot_dimension_numbers<[2], [1], [1], [2], [0, 0, 0, 1, 1, 2], [0], [0]>} : vector<4x8x8xbf16>, vector<4x8x8xbf16>, vector<4x8x8xf32> -> vector<4x8x8xf32>
    "tpu.trace_stop"() : () -> ()
    %85 = vector.extract_strided_slice %84 {offsets = [0, 0, 0], sizes = [1, 8, 8], strides = [1, 1, 1]} : vector<4x8x8xf32> to vector<1x8x8xf32>
    %86 = vector.shape_cast %85 : vector<1x8x8xf32> to vector<8x8xf32>
    %87 = vector.extract_strided_slice %84 {offsets = [1, 0, 0], sizes = [1, 8, 8], strides = [1, 1, 1]} : vector<4x8x8xf32> to vector<1x8x8xf32>
    %88 = vector.shape_cast %87 : vector<1x8x8xf32> to vector<8x8xf32>
    %89 = vector.extract_strided_slice %84 {offsets = [2, 0, 0], sizes = [1, 8, 8], strides = [1, 1, 1]} : vector<4x8x8xf32> to vector<1x8x8xf32>
    %90 = vector.shape_cast %89 : vector<1x8x8xf32> to vector<8x8xf32>
    %91 = vector.extract_strided_slice %84 {offsets = [3, 0, 0], sizes = [1, 8, 8], strides = [1, 1, 1]} : vector<4x8x8xf32> to vector<1x8x8xf32>
    %92 = vector.shape_cast %91 : vector<1x8x8xf32> to vector<8x8xf32>
    %93 = tpu.concatenate %86, %88, %90, %92 in 1 : vector<8x8xf32>, vector<8x8xf32>, vector<8x8xf32>, vector<8x8xf32> -> vector<8x32xf32>
    %94 = arith.truncf %93 : vector<8x32xf32> to vector<8x32xbf16>
    %c0_23 = arith.constant 0 : index
    %c0_24 = arith.constant 0 : index
    %95 = vector.load %arg7[%c0_23, %c0_24] : memref<32x32xbf16, #tpu.memory_space<vmem>>, vector<32x32xbf16>
    %cst_25 = arith.constant dense<0.000000e+00> : vector<8x32xf32>
    %96 = tpu.matmul %94, %95, %cst_25 {dimension_numbers = #tpu.dot_dimension_numbers<[1], [0], [0], [1], [0, 0, 1, 1], [], []>} : vector<8x32xbf16>, vector<32x32xbf16>, vector<8x32xf32> -> vector<8x32xf32>
    %97 = arith.addf %1, %96 : vector<8x32xf32>
    %c0_26 = arith.constant 0 : index
    %c0_27 = arith.constant 0 : index
    %98 = vector.load %arg8[%c0_26, %c0_27] : memref<1x32xf32, #tpu.memory_space<vmem>>, vector<1x32xf32>
    %99 = vector.broadcast %98 : vector<1x32xf32> to vector<8x32xf32>
    %100 = arith.addf %97, %99 : vector<8x32xf32>
    %c0_28 = arith.constant 0 : index
    %c0_29 = arith.constant 0 : index
    %101 = vector.load %arg9[%c0_28, %c0_29] : memref<1x32xf32, #tpu.memory_space<vmem>>, vector<1x32xf32>
    %c0_30 = arith.constant 0 : index
    %c0_31 = arith.constant 0 : index
    %102 = vector.load %arg10[%c0_30, %c0_31] : memref<1x32xf32, #tpu.memory_space<vmem>>, vector<1x32xf32>
    %cst_32 = arith.constant dense<0.000000e+00> : vector<8xf32>
    %103 = vector.multi_reduction <add>, %100, %cst_32 [1] : vector<8x32xf32> to vector<8xf32>
    %104 = vector.shape_cast %103 : vector<8xf32> to vector<8x1xf32>
    %cst_33 = arith.constant 3.200000e+01 : f32
    %105 = vector.broadcast %cst_33 : f32 to vector<8x1xf32>
    %106 = arith.divf %104, %105 : vector<8x1xf32>
    %107 = vector.broadcast %106 : vector<8x1xf32> to vector<8x32xf32>
    %108 = arith.subf %100, %107 : vector<8x32xf32>
    %109 = arith.mulf %108, %108 : vector<8x32xf32>
    %cst_34 = arith.constant dense<0.000000e+00> : vector<8xf32>
    %110 = vector.multi_reduction <add>, %109, %cst_34 [1] : vector<8x32xf32> to vector<8xf32>
    %111 = vector.shape_cast %110 : vector<8xf32> to vector<8x1xf32>
    %cst_35 = arith.constant 3.200000e+01 : f32
    %112 = vector.broadcast %cst_35 : f32 to vector<8x1xf32>
    %113 = arith.divf %111, %112 : vector<8x1xf32>
    %114 = vector.broadcast %106 : vector<8x1xf32> to vector<8x32xf32>
    %115 = arith.subf %100, %114 : vector<8x32xf32>
    %cst_36 = arith.constant 9.99999974E-6 : f32
    %116 = vector.broadcast %cst_36 : f32 to vector<8x1xf32>
    %117 = arith.addf %113, %116 : vector<8x1xf32>
    %118 = math.rsqrt %117 : vector<8x1xf32>
    %119 = vector.broadcast %118 : vector<8x1xf32> to vector<8x32xf32>
    %120 = arith.mulf %115, %119 : vector<8x32xf32>
    %121 = vector.broadcast %101 : vector<1x32xf32> to vector<8x32xf32>
    %122 = arith.mulf %120, %121 : vector<8x32xf32>
    %123 = vector.broadcast %102 : vector<1x32xf32> to vector<8x32xf32>
    %124 = arith.addf %122, %123 : vector<8x32xf32>
    %125 = arith.truncf %124 : vector<8x32xf32> to vector<8x32xbf16>
    %c0_37 = arith.constant 0 : index
    %c0_38 = arith.constant 0 : index
    %126 = vector.load %arg11[%c0_37, %c0_38] : memref<32x64xbf16, #tpu.memory_space<vmem>>, vector<32x64xbf16>
    %cst_39 = arith.constant dense<0.000000e+00> : vector<8x64xf32>
    %127 = tpu.matmul %125, %126, %cst_39 {dimension_numbers = #tpu.dot_dimension_numbers<[1], [0], [0], [1], [0, 0, 1, 1], [], []>} : vector<8x32xbf16>, vector<32x64xbf16>, vector<8x64xf32> -> vector<8x64xf32>
    %c0_40 = arith.constant 0 : index
    %c0_41 = arith.constant 0 : index
    %128 = vector.load %arg12[%c0_40, %c0_41] : memref<1x64xf32, #tpu.memory_space<vmem>>, vector<1x64xf32>
    %129 = vector.broadcast %128 : vector<1x64xf32> to vector<8x64xf32>
    %130 = arith.addf %127, %129 : vector<8x64xf32>
    %cst_42 = arith.constant 0.000000e+00 : f32
    %131 = vector.broadcast %cst_42 : f32 to vector<8x64xf32>
    %132 = arith.maximumf %130, %131 : vector<8x64xf32>
    %133 = arith.truncf %132 : vector<8x64xf32> to vector<8x64xbf16>
    %c0_43 = arith.constant 0 : index
    %c0_44 = arith.constant 0 : index
    %134 = vector.load %arg13[%c0_43, %c0_44] : memref<64x32xbf16, #tpu.memory_space<vmem>>, vector<64x32xbf16>
    %cst_45 = arith.constant dense<0.000000e+00> : vector<8x32xf32>
    %135 = tpu.matmul %133, %134, %cst_45 {dimension_numbers = #tpu.dot_dimension_numbers<[1], [0], [0], [1], [0, 0, 1, 1], [], []>} : vector<8x64xbf16>, vector<64x32xbf16>, vector<8x32xf32> -> vector<8x32xf32>
    %136 = arith.addf %100, %135 : vector<8x32xf32>
    %c0_46 = arith.constant 0 : index
    %c0_47 = arith.constant 0 : index
    %137 = vector.load %arg14[%c0_46, %c0_47] : memref<1x32xf32, #tpu.memory_space<vmem>>, vector<1x32xf32>
    %138 = vector.broadcast %137 : vector<1x32xf32> to vector<8x32xf32>
    %139 = arith.addf %136, %138 : vector<8x32xf32>
    %140 = arith.truncf %139 : vector<8x32xf32> to vector<8x32xbf16>
    %c0_48 = arith.constant 0 : index
    %c0_49 = arith.constant 0 : index
    %141 = vector.load %arg15[%c0_48, %c0_49] : memref<32x64xbf16, #tpu.memory_space<vmem>>, vector<32x64xbf16>
    %cst_50 = arith.constant dense<0.000000e+00> : vector<8x64xf32>
    %142 = tpu.matmul %140, %141, %cst_50 {dimension_numbers = #tpu.dot_dimension_numbers<[1], [0], [0], [1], [0, 0, 1, 1], [], []>} : vector<8x32xbf16>, vector<32x64xbf16>, vector<8x64xf32> -> vector<8x64xf32>
    %c0_51 = arith.constant 0 : index
    %c0_52 = arith.constant 0 : index
    %143 = vector.load %arg16[%c0_51, %c0_52] : memref<1x64xf32, #tpu.memory_space<vmem>>, vector<1x64xf32>
    %144 = vector.broadcast %143 : vector<1x64xf32> to vector<8x64xf32>
    %145 = arith.addf %142, %144 : vector<8x64xf32>
    %cst_53 = arith.constant 0.000000e+00 : f32
    %146 = vector.broadcast %cst_53 : f32 to vector<8x64xf32>
    %147 = arith.maximumf %145, %146 : vector<8x64xf32>
    %148 = arith.truncf %147 : vector<8x64xf32> to vector<8x64xbf16>
    %c0_54 = arith.constant 0 : index
    %c0_55 = arith.constant 0 : index
    %149 = vector.load %arg17[%c0_54, %c0_55] : memref<64x32xbf16, #tpu.memory_space<vmem>>, vector<64x32xbf16>
    %cst_56 = arith.constant dense<0.000000e+00> : vector<8x32xf32>
    %150 = tpu.matmul %148, %149, %cst_56 {dimension_numbers = #tpu.dot_dimension_numbers<[1], [0], [0], [1], [0, 0, 1, 1], [], []>} : vector<8x64xbf16>, vector<64x32xbf16>, vector<8x32xf32> -> vector<8x32xf32>
    %c0_57 = arith.constant 0 : index
    %c0_58 = arith.constant 0 : index
    %151 = vector.load %arg18[%c0_57, %c0_58] : memref<1x32xf32, #tpu.memory_space<vmem>>, vector<1x32xf32>
    %152 = vector.broadcast %151 : vector<1x32xf32> to vector<8x32xf32>
    %153 = arith.addf %150, %152 : vector<8x32xf32>
    %154 = arith.truncf %153 : vector<8x32xf32> to vector<8x32xbf16>
    %c0_59 = arith.constant 0 : index
    %c0_60 = arith.constant 0 : index
    %155 = vector.load %arg19[%c0_59, %c0_60] : memref<32x128xbf16, #tpu.memory_space<vmem>>, vector<32x128xbf16>
    %cst_61 = arith.constant dense<0.000000e+00> : vector<8x128xf32>
    %156 = tpu.matmul %154, %155, %cst_61 {dimension_numbers = #tpu.dot_dimension_numbers<[1], [0], [0], [1], [0, 0, 1, 1], [], []>} : vector<8x32xbf16>, vector<32x128xbf16>, vector<8x128xf32> -> vector<8x128xf32>
    %c0_62 = arith.constant 0 : index
    %c0_63 = arith.constant 0 : index
    %c0_64 = arith.constant 0 : index
    %157 = vector.load %arg20[%c0_62, %c0_63, %c0_64] : memref<1x8x128xf32, #tpu.memory_space<vmem>>, vector<1x8x128xf32>
    %158 = vector.shape_cast %157 : vector<1x8x128xf32> to vector<8x128xf32>
    %159 = vector.shape_cast %156 : vector<8x128xf32> to vector<1x8x128xf32>
    tpu.vector_store %arg20[%c0_62, %c0_63, %c0_64], %159 {strides = array<i32>} : memref<1x8x128xf32, #tpu.memory_space<vmem>>, vector<1x8x128xf32>,
    return
  }
  func.func @transform_0(%arg0: i32) -> (i32, i32, i32) {
    %c0_i32 = arith.constant 0 : i32
    %c0_i32_0 = arith.constant 0 : i32
    %c0_i32_1 = arith.constant 0 : i32
    return %arg0, %c0_i32, %c0_i32_0 : i32, i32, i32
  }
  func.func @transform_1(%arg0: i32) -> (i32, i32, i32) {
    %c0_i32 = arith.constant 0 : i32
    %c0_i32_0 = arith.constant 0 : i32
    %c0_i32_1 = arith.constant 0 : i32
    return %arg0, %c0_i32, %c0_i32_0 : i32, i32, i32
  }
  func.func @transform_2(%arg0: i32) -> (i32, i32) {
    %c0_i32 = arith.constant 0 : i32
    %c0_i32_0 = arith.constant 0 : i32
    %c0_i32_1 = arith.constant 0 : i32
    return %c0_i32, %c0_i32_0 : i32, i32
  }
  func.func @transform_3(%arg0: i32) -> (i32, i32) {
    %c0_i32 = arith.constant 0 : i32
    %c0_i32_0 = arith.constant 0 : i32
    %c0_i32_1 = arith.constant 0 : i32
    return %c0_i32, %c0_i32_0 : i32, i32
  }
  func.func @transform_4(%arg0: i32) -> (i32, i32) {
    %c0_i32 = arith.constant 0 : i32
    %c0_i32_0 = arith.constant 0 : i32
    %c0_i32_1 = arith.constant 0 : i32
    return %c0_i32, %c0_i32_0 : i32, i32
  }
  func.func @transform_5(%arg0: i32) -> (i32, i32) {
    %c0_i32 = arith.constant 0 : i32
    %c0_i32_0 = arith.constant 0 : i32
    %c0_i32_1 = arith.constant 0 : i32
    return %c0_i32, %c0_i32_0 : i32, i32
  }
  func.func @transform_6(%arg0: i32) -> (i32, i32) {
    %c0_i32 = arith.constant 0 : i32
    %c0_i32_0 = arith.constant 0 : i32
    %c0_i32_1 = arith.constant 0 : i32
    return %c0_i32, %c0_i32_0 : i32, i32
  }
  func.func @transform_7(%arg0: i32) -> (i32, i32) {
    %c0_i32 = arith.constant 0 : i32
    %c0_i32_0 = arith.constant 0 : i32
    %c0_i32_1 = arith.constant 0 : i32
    return %c0_i32, %c0_i32_0 : i32, i32
  }
  func.func @transform_8(%arg0: i32) -> (i32, i32) {
    %c0_i32 = arith.constant 0 : i32
    %c0_i32_0 = arith.constant 0 : i32
    %c0_i32_1 = arith.constant 0 : i32
    return %c0_i32, %c0_i32_0 : i32, i32
  }
  func.func @transform_9(%arg0: i32) -> (i32, i32) {
    %c0_i32 = arith.constant 0 : i32
    %c0_i32_0 = arith.constant 0 : i32
    %c0_i32_1 = arith.constant 0 : i32
    return %c0_i32, %c0_i32_0 : i32, i32
  }
  func.func @transform_10(%arg0: i32) -> (i32, i32) {
    %c0_i32 = arith.constant 0 : i32
    %c0_i32_0 = arith.constant 0 : i32
    %c0_i32_1 = arith.constant 0 : i32
    return %c0_i32, %c0_i32_0 : i32, i32
  }
  func.func @transform_11(%arg0: i32) -> (i32, i32) {
    %c0_i32 = arith.constant 0 : i32
    %c0_i32_0 = arith.constant 0 : i32
    %c0_i32_1 = arith.constant 0 : i32
    return %c0_i32, %c0_i32_0 : i32, i32
  }
  func.func @transform_12(%arg0: i32) -> (i32, i32) {
    %c0_i32 = arith.constant 0 : i32
    %c0_i32_0 = arith.constant 0 : i32
    %c0_i32_1 = arith.constant 0 : i32
    return %c0_i32, %c0_i32_0 : i32, i32
  }
  func.func @transform_13(%arg0: i32) -> (i32, i32) {
    %c0_i32 = arith.constant 0 : i32
    %c0_i32_0 = arith.constant 0 : i32
    %c0_i32_1 = arith.constant 0 : i32
    return %c0_i32, %c0_i32_0 : i32, i32
  }
  func.func @transform_14(%arg0: i32) -> (i32, i32) {
    %c0_i32 = arith.constant 0 : i32
    %c0_i32_0 = arith.constant 0 : i32
    %c0_i32_1 = arith.constant 0 : i32
    return %c0_i32, %c0_i32_0 : i32, i32
  }
  func.func @transform_15(%arg0: i32) -> (i32, i32) {
    %c0_i32 = arith.constant 0 : i32
    %c0_i32_0 = arith.constant 0 : i32
    %c0_i32_1 = arith.constant 0 : i32
    return %c0_i32, %c0_i32_0 : i32, i32
  }
  func.func @transform_16(%arg0: i32) -> (i32, i32) {
    %c0_i32 = arith.constant 0 : i32
    %c0_i32_0 = arith.constant 0 : i32
    %c0_i32_1 = arith.constant 0 : i32
    return %c0_i32, %c0_i32_0 : i32, i32
  }
  func.func @transform_17(%arg0: i32) -> (i32, i32) {
    %c0_i32 = arith.constant 0 : i32
    %c0_i32_0 = arith.constant 0 : i32
    %c0_i32_1 = arith.constant 0 : i32
    return %c0_i32, %c0_i32_0 : i32, i32
  }
  func.func @transform_18(%arg0: i32) -> (i32, i32) {
    %c0_i32 = arith.constant 0 : i32
    %c0_i32_0 = arith.constant 0 : i32
    %c0_i32_1 = arith.constant 0 : i32
    return %c0_i32, %c0_i32_0 : i32, i32
  }
  func.func @transform_19(%arg0: i32) -> (i32, i32, i32) {
    %c0_i32 = arith.constant 0 : i32
    %c0_i32_0 = arith.constant 0 : i32
    %c0_i32_1 = arith.constant 0 : i32
    return %arg0, %c0_i32, %c0_i32_0 : i32, i32, i32
  }
}

</mosaic_0001>

<llo_original>
// kernel: tpu_custom_call.1
$region0: #{tpu_custom_call.1}
  #allocation0 [shape = 'u32[]', space=smem, size = 0x4, offset = 0x4, fixed_abs, tag = 'smem constant byte address 0x4 - core index']
  #allocation1 [shape = 'u32[72,128]{1,0:T(1,128)}', space=vmem, size = 0x9000, scoped, tag = 'internal scratch']
  %s0 = inlined_call_operand.vmem [shape: f32[2,8,32], index: 0, kind: input, shape index: {}]
  %s1 = inlined_call_operand.hbm [shape: f32[2,1,8], index: 1, kind: input, shape index: {}]
  %s2 = inlined_call_operand.vmem [shape: f32[1,32], index: 2, kind: input, shape index: {}]
  %s3 = inlined_call_operand.hbm [shape: f32[1,32], index: 3, kind: input, shape index: {}]
  %s4 = inlined_call_operand.vmem [shape: bf16[32,96], index: 4, kind: input, shape index: {}]
  %s5 = inlined_call_operand.vmem [shape: f32[1,96], index: 5, kind: input, shape index: {}]
  %s6 = inlined_call_operand.vmem [shape: bf16[32,32], index: 6, kind: input, shape index: {}]
  %s7 = inlined_call_operand.vmem [shape: f32[1,32], index: 7, kind: input, shape index: {}]
  %s8 = inlined_call_operand.vmem [shape: f32[1,32], index: 8, kind: input, shape index: {}]
  %s9 = inlined_call_operand.vmem [shape: f32[1,32], index: 9, kind: input, shape index: {}]
  %s10 = inlined_call_operand.vmem [shape: bf16[32,64], index: 10, kind: input, shape index: {}]
  %s11 = inlined_call_operand.vmem [shape: f32[1,64], index: 11, kind: input, shape index: {}]
  %s12 = inlined_call_operand.vmem [shape: bf16[64,32], index: 12, kind: input, shape index: {}]
  %s13 = inlined_call_operand.vmem [shape: f32[1,32], index: 13, kind: input, shape index: {}]
  %s14 = inlined_call_operand.vmem [shape: bf16[32,64], index: 14, kind: input, shape index: {}]
  %s15 = inlined_call_operand.vmem [shape: f32[1,64], index: 15, kind: input, shape index: {}]
  %s16 = inlined_call_operand.vmem [shape: bf16[64,32], index: 16, kind: input, shape index: {}]
  %s17 = inlined_call_operand.vmem [shape: f32[1,32], index: 17, kind: input, shape index: {}]
  %s18 = inlined_call_operand.vmem [shape: bf16[32,128], index: 18, kind: input, shape index: {}]
  %s19 = inlined_call_operand.hbm [shape: f32[2,8,128], index: 19, kind: output, shape index: {}]
  %s20 = sld [smem:[#allocation0]]
  $region117: #{tpu_custom_call.1} parent=0
    _
  %s22 = ssub.s32 1, %s20
  %s23 = scalar_select 0, %s22, %s20
  $region1: #{tpu_custom_call.1} parent=0
    #allocation2 [shape = 'u8[1024]{0}', space=vmem, size = 0x400, scoped, tag = 'input window, operand 1']
    #allocation3 [shape = 's32[2]{0}', space=sflag, size = 0x8, scoped, tag = 'scoped memory for tpu_custom_call.1']
    #allocation4 [shape = 's32[2]{0}', space=sflag, size = 0x8, scoped, tag = 'scoped memory for tpu_custom_call.1']
    #allocation5 [shape = 'u8[512]{0}', space=vmem, size = 0x400, scoped, tag = 'input window, operand 3, single buffered']
    #allocation6 [shape = 's32[1]{0}', space=sflag, size = 0x4, scoped, tag = 'scoped memory for tpu_custom_call.1']
    #allocation7 [shape = 'u8[8192]{0}', space=vmem, size = 0x2000, scoped, tag = 'output window, operand 0']
    %24 = vsyncpa [#allocation3], 0
    %s25 = scalar_lea.sflag [#allocation3], 1
    %26 = vsyncpa %s25, 0
    %27 = vsyncpa [#allocation6], 0
    %28 = vsyncpa [#allocation4], 0
    %s29 = scalar_lea.sflag [#allocation4], 1
    %30 = vsyncpa %s29, 0
    loop: start=0, step=1, limit=4
    $region2: #{tpu_custom_call.1} parent=1 // loop_pre_header
      _
    $region3: #{tpu_custom_call.1} parent=1 // loop_header
      %s32 = sphi 0, %s36
      %p33 = scmp.ge.s32.totalorder %s32, 4
      %s42 = sphi 0, %s44
      %s45 = sphi 0, %s42
      %s46 = sphi 0, %s45
      %s62 = sphi 0, %s46
      %s68 = sphi 0, %s70
      %s71 = sphi 0, %s68
      %s72 = sphi 0, %s71
      %s88 = sphi 0, %s72
      %s92 = sphi 0, %s92
      %s94 = sphi 0, %s92
      %s95 = sphi 0, %s94
      %s109 = sphi 0, %s95
      %s113 = sphi 0, %s113
      %s115 = sphi 0, %s113
      %s116 = sphi 0, %s115
      %s130 = sphi 0, %s116
      %s134 = sphi 0, %s134
      %s136 = sphi 0, %s134
      %s137 = sphi 0, %s136
      %s151 = sphi 0, %s137
      %s155 = sphi 0, %s155
      %s157 = sphi 0, %s155
      %s158 = sphi 0, %s157
      %s172 = sphi 0, %s158
      %s176 = sphi 0, %s176
      %s178 = sphi 0, %s176
      %s179 = sphi 0, %s178
      %s193 = sphi 0, %s179
      %s197 = sphi 0, %s197
      %s199 = sphi 0, %s197
      %s200 = sphi 0, %s199
      %s214 = sphi 0, %s200
      %s218 = sphi 0, %s218
      %s220 = sphi 0, %s218
      %s221 = sphi 0, %s220
      %s235 = sphi 0, %s221
      %s239 = sphi 0, %s239
      %s241 = sphi 0, %s239
      %s242 = sphi 0, %s241
      %s256 = sphi 0, %s242
      %s260 = sphi 0, %s260
      %s262 = sphi 0, %s260
      %s263 = sphi 0, %s262
      %s277 = sphi 0, %s263
      %s281 = sphi 0, %s281
      %s283 = sphi 0, %s281
      %s284 = sphi 0, %s283
      %s298 = sphi 0, %s284
      %s302 = sphi 0, %s302
      %s304 = sphi 0, %s302
      %s305 = sphi 0, %s304
      %s319 = sphi 0, %s305
      %s323 = sphi 0, %s323
      %s325 = sphi 0, %s323
      %s326 = sphi 0, %s325
      %s340 = sphi 0, %s326
      %s344 = sphi 0, %s344
      %s346 = sphi 0, %s344
      %s347 = sphi 0, %s346
      %s361 = sphi 0, %s347
      %s365 = sphi 0, %s365
      %s367 = sphi 0, %s365
      %s368 = sphi 0, %s367
      %s382 = sphi 0, %s368
      %s386 = sphi 0, %s386
      %s388 = sphi 0, %s386
      %s389 = sphi 0, %s388
      %s403 = sphi 0, %s389
      %s407 = sphi 0, %s407
      %s409 = sphi 0, %s407
      %s410 = sphi 0, %s409
      %s424 = sphi 0, %s410
      %s428 = sphi 0, %s428
      %s430 = sphi 0, %s428
      %s431 = sphi 0, %s430
      %s445 = sphi 0, %s431
      %s451 = sphi 0, %s453
      %s454 = sphi 0, %s451
      %s455 = sphi 0, %s454
      %s471 = sphi 0, %s455
    $region4: #{tpu_custom_call.1} parent=1 // loop_header_branch
      %35 = sbr.rel (%p33) target = $region8
    $region5: #{tpu_custom_call.1} parent=1 // loop_body
      %s37 = ssub.s32 %s32, 1
      %s38 = ssub.s32 %s32, 2
      %s39 = sadd.s32 %s32, 1
      %s40 = ssub.s32 %s32, %s39
      %p41 = scmp.eq.s32.totalorder %s40, 0
      %s43 = sadd.s32 %s42, 1
      %s44 = scalar_select %p41, %s42, %s43
      %p47 = pneg %p41
      %p48 = scmp.eq.s32.totalorder %s32, 1
      %p49 = por %p47, %p48
      %p50 = scmp.ne.s32.totalorder %s42, %s45
      %p51 = scmp.eq.s32.totalorder %s32, 0
      %p52 = por %p50, %p51
      %p53 = scmp.ne.s32.totalorder %s42, %s45
      %p54 = scmp.eq.s32.totalorder %s37, 1
      %p55 = por %p53, %p54
      %p56 = scmp.ne.s32.totalorder %s45, %s46
      %p57 = scmp.eq.s32.totalorder %s37, 0
      %p58 = por %p56, %p57
      %p59 = scmp.ne.s32.totalorder %s45, %s46
      %p60 = scmp.eq.s32.totalorder %s38, 1
      %p61 = por %p59, %p60
      %p63 = scmp.ne.s32.totalorder %s46, %s62
      %p64 = scmp.eq.s32.totalorder %s38, 0
      %p65 = por %p63, %p64
      %s66 = ssub.s32 %s32, %s39
      %p67 = scmp.eq.s32.totalorder %s66, 0
      %s69 = sadd.s32 %s68, 1
      %s70 = scalar_select %p67, %s68, %s69
      %p73 = pneg %p67
      %p74 = scmp.eq.s32.totalorder %s32, 1
      %p75 = por %p73, %p74
      %p76 = scmp.ne.s32.totalorder %s68, %s71
      %p77 = scmp.eq.s32.totalorder %s32, 0
      %p78 = por %p76, %p77
      %p79 = scmp.ne.s32.totalorder %s68, %s71
      %p80 = scmp.eq.s32.totalorder %s37, 1
      %p81 = por %p79, %p80
      %p82 = scmp.ne.s32.totalorder %s71, %s72
      %p83 = scmp.eq.s32.totalorder %s37, 0
      %p84 = por %p82, %p83
      %p85 = scmp.ne.s32.totalorder %s71, %s72
      %p86 = scmp.eq.s32.totalorder %s38, 1
      %p87 = por %p85, %p86
      %p89 = scmp.ne.s32.totalorder %s72, %s88
      %p90 = scmp.eq.s32.totalorder %s38, 0
      %p91 = por %p89, %p90
      %s93 = sadd.s32 %s92, 1
      %p96 = scmp.eq.s32.totalorder %s32, 1
      %p97 = scmp.ne.s32.totalorder %s92, %s94
      %p98 = scmp.eq.s32.totalorder %s32, 0
      %p99 = por %p97, %p98
      %p100 = scmp.ne.s32.totalorder %s92, %s94
      %p101 = scmp.eq.s32.totalorder %s37, 1
      %p102 = por %p100, %p101
      %p103 = scmp.ne.s32.totalorder %s94, %s95
      %p104 = scmp.eq.s32.totalorder %s37, 0
      %p105 = por %p103, %p104
      %p106 = scmp.ne.s32.totalorder %s94, %s95
      %p107 = scmp.eq.s32.totalorder %s38, 1
      %p108 = por %p106, %p107
      %p110 = scmp.ne.s32.totalorder %s95, %s109
      %p111 = scmp.eq.s32.totalorder %s38, 0
      %p112 = por %p110, %p111
      %s114 = sadd.s32 %s113, 1
      %p117 = scmp.eq.s32.totalorder %s32, 1
      %p118 = scmp.ne.s32.totalorder %s113, %s115
      %p119 = scmp.eq.s32.totalorder %s32, 0
      %p120 = por %p118, %p119
      %p121 = scmp.ne.s32.totalorder %s113, %s115
      %p122 = scmp.eq.s32.totalorder %s37, 1
      %p123 = por %p121, %p122
      %p124 = scmp.ne.s32.totalorder %s115, %s116
      %p125 = scmp.eq.s32.totalorder %s37, 0
      %p126 = por %p124, %p125
      %p127 = scmp.ne.s32.totalorder %s115, %s116
      %p128 = scmp.eq.s32.totalorder %s38, 1
      %p129 = por %p127, %p128
      %p131 = scmp.ne.s32.totalorder %s116, %s130
      %p132 = scmp.eq.s32.totalorder %s38, 0
      %p133 = por %p131, %p132
      %s135 = sadd.s32 %s134, 1
      %p138 = scmp.eq.s32.totalorder %s32, 1
      %p139 = scmp.ne.s32.totalorder %s134, %s136
      %p140 = scmp.eq.s32.totalorder %s32, 0
      %p141 = por %p139, %p140
      %p142 = scmp.ne.s32.totalorder %s134, %s136
      %p143 = scmp.eq.s32.totalorder %s37, 1
      %p144 = por %p142, %p143
      %p145 = scmp.ne.s32.totalorder %s136, %s137
      %p146 = scmp.eq.s32.totalorder %s37, 0
      %p147 = por %p145, %p146
      %p148 = scmp.ne.s32.totalorder %s136, %s137
      %p149 = scmp.eq.s32.totalorder %s38, 1
      %p150 = por %p148, %p149
      %p152 = scmp.ne.s32.totalorder %s137, %s151
      %p153 = scmp.eq.s32.totalorder %s38, 0
      %p154 = por %p152, %p153
      %s156 = sadd.s32 %s155, 1
      %p159 = scmp.eq.s32.totalorder %s32, 1
      %p160 = scmp.ne.s32.totalorder %s155, %s157
      %p161 = scmp.eq.s32.totalorder %s32, 0
      %p162 = por %p160, %p161
      %p163 = scmp.ne.s32.totalorder %s155, %s157
      %p164 = scmp.eq.s32.totalorder %s37, 1
      %p165 = por %p163, %p164
      %p166 = scmp.ne.s32.totalorder %s157, %s158
      %p167 = scmp.eq.s32.totalorder %s37, 0
      %p168 = por %p166, %p167
      %p169 = scmp.ne.s32.totalorder %s157, %s158
      %p170 = scmp.eq.s32.totalorder %s38, 1
      %p171 = por %p169, %p170
      %p173 = scmp.ne.s32.totalorder %s158, %s172
      %p174 = scmp.eq.s32.totalorder %s38, 0
      %p175 = por %p173, %p174
      %s177 = sadd.s32 %s176, 1
      %p180 = scmp.eq.s32.totalorder %s32, 1
      %p181 = scmp.ne.s32.totalorder %s176, %s178
      %p182 = scmp.eq.s32.totalorder %s32, 0
      %p183 = por %p181, %p182
      %p184 = scmp.ne.s32.totalorder %s176, %s178
      %p185 = scmp.eq.s32.totalorder %s37, 1
      %p186 = por %p184, %p185
      %p187 = scmp.ne.s32.totalorder %s178, %s179
      %p188 = scmp.eq.s32.totalorder %s37, 0
      %p189 = por %p187, %p188
      %p190 = scmp.ne.s32.totalorder %s178, %s179
      %p191 = scmp.eq.s32.totalorder %s38, 1
      %p192 = por %p190, %p191
      %p194 = scmp.ne.s32.totalorder %s179, %s193
      %p195 = scmp.eq.s32.totalorder %s38, 0
      %p196 = por %p194, %p195
      %s198 = sadd.s32 %s197, 1
      %p201 = scmp.eq.s32.totalorder %s32, 1
      %p202 = scmp.ne.s32.totalorder %s197, %s199
      %p203 = scmp.eq.s32.totalorder %s32, 0
      %p204 = por %p202, %p203
      %p205 = scmp.ne.s32.totalorder %s197, %s199
      %p206 = scmp.eq.s32.totalorder %s37, 1
      %p207 = por %p205, %p206
      %p208 = scmp.ne.s32.totalorder %s199, %s200
      %p209 = scmp.eq.s32.totalorder %s37, 0
      %p210 = por %p208, %p209
      %p211 = scmp.ne.s32.totalorder %s199, %s200
      %p212 = scmp.eq.s32.totalorder %s38, 1
      %p213 = por %p211, %p212
      %p215 = scmp.ne.s32.totalorder %s200, %s214
      %p216 = scmp.eq.s32.totalorder %s38, 0
      %p217 = por %p215, %p216
      %s219 = sadd.s32 %s218, 1
      %p222 = scmp.eq.s32.totalorder %s32, 1
      %p223 = scmp.ne.s32.totalorder %s218, %s220
      %p224 = scmp.eq.s32.totalorder %s32, 0
      %p225 = por %p223, %p224
      %p226 = scmp.ne.s32.totalorder %s218, %s220
      %p227 = scmp.eq.s32.totalorder %s37, 1
      %p228 = por %p226, %p227
      %p229 = scmp.ne.s32.totalorder %s220, %s221
      %p230 = scmp.eq.s32.totalorder %s37, 0
      %p231 = por %p229, %p230
      %p232 = scmp.ne.s32.totalorder %s220, %s221
      %p233 = scmp.eq.s32.totalorder %s38, 1
      %p234 = por %p232, %p233
      %p236 = scmp.ne.s32.totalorder %s221, %s235
      %p237 = scmp.eq.s32.totalorder %s38, 0
      %p238 = por %p236, %p237
      %s240 = sadd.s32 %s239, 1
      %p243 = scmp.eq.s32.totalorder %s32, 1
      %p244 = scmp.ne.s32.totalorder %s239, %s241
      %p245 = scmp.eq.s32.totalorder %s32, 0
      %p246 = por %p244, %p245
      %p247 = scmp.ne.s32.totalorder %s239, %s241
      %p248 = scmp.eq.s32.totalorder %s37, 1
      %p249 = por %p247, %p248
      %p250 = scmp.ne.s32.totalorder %s241, %s242
      %p251 = scmp.eq.s32.totalorder %s37, 0
      %p252 = por %p250, %p251
      %p253 = scmp.ne.s32.totalorder %s241, %s242
      %p254 = scmp.eq.s32.totalorder %s38, 1
      %p255 = por %p253, %p254
      %p257 = scmp.ne.s32.totalorder %s242, %s256
      %p258 = scmp.eq.s32.totalorder %s38, 0
      %p259 = por %p257, %p258
      %s261 = sadd.s32 %s260, 1
      %p264 = scmp.eq.s32.totalorder %s32, 1
      %p265 = scmp.ne.s32.totalorder %s260, %s262
      %p266 = scmp.eq.s32.totalorder %s32, 0
      %p267 = por %p265, %p266
      %p268 = scmp.ne.s32.totalorder %s260, %s262
      %p269 = scmp.eq.s32.totalorder %s37, 1
      %p270 = por %p268, %p269
      %p271 = scmp.ne.s32.totalorder %s262, %s263
      %p272 = scmp.eq.s32.totalorder %s37, 0
      %p273 = por %p271, %p272
      %p274 = scmp.ne.s32.totalorder %s262, %s263
      %p275 = scmp.eq.s32.totalorder %s38, 1
      %p276 = por %p274, %p275
      %p278 = scmp.ne.s32.totalorder %s263, %s277
      %p279 = scmp.eq.s32.totalorder %s38, 0
      %p280 = por %p278, %p279
      %s282 = sadd.s32 %s281, 1
      %p285 = scmp.eq.s32.totalorder %s32, 1
      %p286 = scmp.ne.s32.totalorder %s281, %s283
      %p287 = scmp.eq.s32.totalorder %s32, 0
      %p288 = por %p286, %p287
      %p289 = scmp.ne.s32.totalorder %s281, %s283
      %p290 = scmp.eq.s32.totalorder %s37, 1
      %p291 = por %p289, %p290
      %p292 = scmp.ne.s32.totalorder %s283, %s284
      %p293 = scmp.eq.s32.totalorder %s37, 0
      %p294 = por %p292, %p293
      %p295 = scmp.ne.s32.totalorder %s283, %s284
      %p296 = scmp.eq.s32.totalorder %s38, 1
      %p297 = por %p295, %p296
      %p299 = scmp.ne.s32.totalorder %s284, %s298
      %p300 = scmp.eq.s32.totalorder %s38, 0
      %p301 = por %p299, %p300
      %s303 = sadd.s32 %s302, 1
      %p306 = scmp.eq.s32.totalorder %s32, 1
      %p307 = scmp.ne.s32.totalorder %s302, %s304
      %p308 = scmp.eq.s32.totalorder %s32, 0
      %p309 = por %p307, %p308
      %p310 = scmp.ne.s32.totalorder %s302, %s304
      %p311 = scmp.eq.s32.totalorder %s37, 1
      %p312 = por %p310, %p311
      %p313 = scmp.ne.s32.totalorder %s304, %s305
      %p314 = scmp.eq.s32.totalorder %s37, 0
      %p315 = por %p313, %p314
      %p316 = scmp.ne.s32.totalorder %s304, %s305
      %p317 = scmp.eq.s32.totalorder %s38, 1
      %p318 = por %p316, %p317
      %p320 = scmp.ne.s32.totalorder %s305, %s319
      %p321 = scmp.eq.s32.totalorder %s38, 0
      %p322 = por %p320, %p321
      %s324 = sadd.s32 %s323, 1
      %p327 = scmp.eq.s32.totalorder %s32, 1
      %p328 = scmp.ne.s32.totalorder %s323, %s325
      %p329 = scmp.eq.s32.totalorder %s32, 0
      %p330 = por %p328, %p329
      %p331 = scmp.ne.s32.totalorder %s323, %s325
      %p332 = scmp.eq.s32.totalorder %s37, 1
      %p333 = por %p331, %p332
      %p334 = scmp.ne.s32.totalorder %s325, %s326
      %p335 = scmp.eq.s32.totalorder %s37, 0
      %p336 = por %p334, %p335
      %p337 = scmp.ne.s32.totalorder %s325, %s326
      %p338 = scmp.eq.s32.totalorder %s38, 1
      %p339 = por %p337, %p338
      %p341 = scmp.ne.s32.totalorder %s326, %s340
      %p342 = scmp.eq.s32.totalorder %s38, 0
      %p343 = por %p341, %p342
      %s345 = sadd.s32 %s344, 1
      %p348 = scmp.eq.s32.totalorder %s32, 1
      %p349 = scmp.ne.s32.totalorder %s344, %s346
      %p350 = scmp.eq.s32.totalorder %s32, 0
      %p351 = por %p349, %p350
      %p352 = scmp.ne.s32.totalorder %s344, %s346
      %p353 = scmp.eq.s32.totalorder %s37, 1
      %p354 = por %p352, %p353
      %p355 = scmp.ne.s32.totalorder %s346, %s347
      %p356 = scmp.eq.s32.totalorder %s37, 0
      %p357 = por %p355, %p356
      %p358 = scmp.ne.s32.totalorder %s346, %s347
      %p359 = scmp.eq.s32.totalorder %s38, 1
      %p360 = por %p358, %p359
      %p362 = scmp.ne.s32.totalorder %s347, %s361
      %p363 = scmp.eq.s32.totalorder %s38, 0
      %p364 = por %p362, %p363
      %s366 = sadd.s32 %s365, 1
      %p369 = scmp.eq.s32.totalorder %s32, 1
      %p370 = scmp.ne.s32.totalorder %s365, %s367
      %p371 = scmp.eq.s32.totalorder %s32, 0
      %p372 = por %p370, %p371
      %p373 = scmp.ne.s32.totalorder %s365, %s367
      %p374 = scmp.eq.s32.totalorder %s37, 1
      %p375 = por %p373, %p374
      %p376 = scmp.ne.s32.totalorder %s367, %s368
      %p377 = scmp.eq.s32.totalorder %s37, 0
      %p378 = por %p376, %p377
      %p379 = scmp.ne.s32.totalorder %s367, %s368
      %p380 = scmp.eq.s32.totalorder %s38, 1
      %p381 = por %p379, %p380
      %p383 = scmp.ne.s32.totalorder %s368, %s382
      %p384 = scmp.eq.s32.totalorder %s38, 0
      %p385 = por %p383, %p384
      %s387 = sadd.s32 %s386, 1
      %p390 = scmp.eq.s32.totalorder %s32, 1
      %p391 = scmp.ne.s32.totalorder %s386, %s388
      %p392 = scmp.eq.s32.totalorder %s32, 0
      %p393 = por %p391, %p392
      %p394 = scmp.ne.s32.totalorder %s386, %s388
      %p395 = scmp.eq.s32.totalorder %s37, 1
      %p396 = por %p394, %p395
      %p397 = scmp.ne.s32.totalorder %s388, %s389
      %p398 = scmp.eq.s32.totalorder %s37, 0
      %p399 = por %p397, %p398
      %p400 = scmp.ne.s32.totalorder %s388, %s389
      %p401 = scmp.eq.s32.totalorder %s38, 1
      %p402 = por %p400, %p401
      %p404 = scmp.ne.s32.totalorder %s389, %s403
      %p405 = scmp.eq.s32.totalorder %s38, 0
      %p406 = por %p404, %p405
      %s408 = sadd.s32 %s407, 1
      %p411 = scmp.eq.s32.totalorder %s32, 1
      %p412 = scmp.ne.s32.totalorder %s407, %s409
      %p413 = scmp.eq.s32.totalorder %s32, 0
      %p414 = por %p412, %p413
      %p415 = scmp.ne.s32.totalorder %s407, %s409
      %p416 = scmp.eq.s32.totalorder %s37, 1
      %p417 = por %p415, %p416
      %p418 = scmp.ne.s32.totalorder %s409, %s410
      %p419 = scmp.eq.s32.totalorder %s37, 0
      %p420 = por %p418, %p419
      %p421 = scmp.ne.s32.totalorder %s409, %s410
      %p422 = scmp.eq.s32.totalorder %s38, 1
      %p423 = por %p421, %p422
      %p425 = scmp.ne.s32.totalorder %s410, %s424
      %p426 = scmp.eq.s32.totalorder %s38, 0
      %p427 = por %p425, %p426
      %s429 = sadd.s32 %s428, 1
      %p432 = scmp.eq.s32.totalorder %s32, 1
      %p433 = scmp.ne.s32.totalorder %s428, %s430
      %p434 = scmp.eq.s32.totalorder %s32, 0
      %p435 = por %p433, %p434
      %p436 = scmp.ne.s32.totalorder %s428, %s430
      %p437 = scmp.eq.s32.totalorder %s37, 1
      %p438 = por %p436, %p437
      %p439 = scmp.ne.s32.totalorder %s430, %s431
      %p440 = scmp.eq.s32.totalorder %s37, 0
      %p441 = por %p439, %p440
      %p442 = scmp.ne.s32.totalorder %s430, %s431
      %p443 = scmp.eq.s32.totalorder %s38, 1
      %p444 = por %p442, %p443
      %p446 = scmp.ne.s32.totalorder %s431, %s445
      %p447 = scmp.eq.s32.totalorder %s38, 0
      %p448 = por %p446, %p447
      %s449 = ssub.s32 %s32, %s39
      %p450 = scmp.eq.s32.totalorder %s449, 0
      %s452 = sadd.s32 %s451, 1
      %s453 = scalar_select %p450, %s451, %s452
      %p456 = pneg %p450
      %p457 = scmp.eq.s32.totalorder %s32, 1
      %p458 = por %p456, %p457
      %p459 = scmp.ne.s32.totalorder %s451, %s454
      %p460 = scmp.eq.s32.totalorder %s32, 0
      %p461 = por %p459, %p460
      %p462 = scmp.ne.s32.totalorder %s451, %s454
      %p463 = scmp.eq.s32.totalorder %s37, 1
      %p464 = por %p462, %p463
      %p465 = scmp.ne.s32.totalorder %s454, %s455
      %p466 = scmp.eq.s32.totalorder %s37, 0
      %p467 = por %p465, %p466
      %p468 = scmp.ne.s32.totalorder %s454, %s455
      %p469 = scmp.eq.s32.totalorder %s38, 1
      %p470 = por %p468, %p469
      %p472 = scmp.ne.s32.totalorder %s455, %s471
      %p473 = scmp.eq.s32.totalorder %s38, 0
      %p474 = por %p472, %p473
      %p475 = scmp.le.s32.totalorder 1, %s32
      %p476 = scmp.lt.s32.totalorder %s32, 3
      %p477 = pnand %p475, %p476
      %p478 = pneg %p477
      // Predicated region
      $region9: #{tpu_custom_call.1} parent=5 // pred_check
        _
      $region10: #{tpu_custom_call.1} parent=5 // pred_check_branch
        %480 = sbr.rel (%p477) target = $region12
      $region11: #{tpu_custom_call.1} parent=5 // pred_region
        %s481 = ssub.s32 %s32, 1
        // Predicated region
        $region13: #{tpu_custom_call.1} parent=11 // pred_check
          %p482 = pneg %p105
        $region14: #{tpu_custom_call.1} parent=11 // pred_check_branch
          %484 = sbr.rel (%p482) target = $region16
        $region15: #{tpu_custom_call.1} parent=11 // pred_region
          _
        $region16: #{tpu_custom_call.1} parent=11 // pred_fallthru
          _
        // Predicated region
        $region17: #{tpu_custom_call.1} parent=11 // pred_check
          %p485 = pneg %p126
        $region18: #{tpu_custom_call.1} parent=11 // pred_check_branch
          %487 = sbr.rel (%p485) target = $region20
        $region19: #{tpu_custom_call.1} parent=11 // pred_region
          %489 = vsyncadd [#allocation6], 0
          %s491 = sshll.u32 %s3, 4
          %s492 = int_to_ptr.hbm [resolvable:$true] %s491
          %s493 = sshll.u32 [#allocation5], 4
          %s494 = int_to_ptr.vmem [resolvable:$true] %s493
          %496 = dma.hbm_to_vmem [thread:$0]  %s492, 16, %s494, [#allocation6]
        $region20: #{tpu_custom_call.1} parent=11 // pred_fallthru
          _
        // Predicated region
        $region21: #{tpu_custom_call.1} parent=11 // pred_check
          %p497 = pneg %p147
        $region22: #{tpu_custom_call.1} parent=11 // pred_check_branch
          %499 = sbr.rel (%p497) target = $region24
        $region23: #{tpu_custom_call.1} parent=11 // pred_region
          _
        $region24: #{tpu_custom_call.1} parent=11 // pred_fallthru
          _
        // Predicated region
        $region25: #{tpu_custom_call.1} parent=11 // pred_check
          %p500 = pneg %p168
        $region26: #{tpu_custom_call.1} parent=11 // pred_check_branch
          %502 = sbr.rel (%p500) target = $region28
        $region27: #{tpu_custom_call.1} parent=11 // pred_region
          _
        $region28: #{tpu_custom_call.1} parent=11 // pred_fallthru
          _
        // Predicated region
        $region29: #{tpu_custom_call.1} parent=11 // pred_check
          %p503 = pneg %p189
        $region30: #{tpu_custom_call.1} parent=11 // pred_check_branch
          %505 = sbr.rel (%p503) target = $region32
        $region31: #{tpu_custom_call.1} parent=11 // pred_region
          _
        $region32: #{tpu_custom_call.1} parent=11 // pred_fallthru
          _
        // Predicated region
        $region33: #{tpu_custom_call.1} parent=11 // pred_check
          %p506 = pneg %p210
        $region34: #{tpu_custom_call.1} parent=11 // pred_check_branch
          %508 = sbr.rel (%p506) target = $region36
        $region35: #{tpu_custom_call.1} parent=11 // pred_region
          _
        $region36: #{tpu_custom_call.1} parent=11 // pred_fallthru
          _
        // Predicated region
        $region37: #{tpu_custom_call.1} parent=11 // pred_check
          %p509 = pneg %p231
        $region38: #{tpu_custom_call.1} parent=11 // pred_check_branch
          %511 = sbr.rel (%p509) target = $region40
        $region39: #{tpu_custom_call.1} parent=11 // pred_region
          _
        $region40: #{tpu_custom_call.1} parent=11 // pred_fallthru
          _
        // Predicated region
        $region41: #{tpu_custom_call.1} parent=11 // pred_check
          %p512 = pneg %p252
        $region42: #{tpu_custom_call.1} parent=11 // pred_check_branch
          %514 = sbr.rel (%p512) target = $region44
        $region43: #{tpu_custom_call.1} parent=11 // pred_region
          _
        $region44: #{tpu_custom_call.1} parent=11 // pred_fallthru
          _
        // Predicated region
        $region45: #{tpu_custom_call.1} parent=11 // pred_check
          %p515 = pneg %p273
        $region46: #{tpu_custom_call.1} parent=11 // pred_check_branch
          %517 = sbr.rel (%p515) target = $region48
        $region47: #{tpu_custom_call.1} parent=11 // pred_region
          _
        $region48: #{tpu_custom_call.1} parent=11 // pred_fallthru
          _
        // Predicated region
        $region49: #{tpu_custom_call.1} parent=11 // pred_check
          %p518 = pneg %p294
        $region50: #{tpu_custom_call.1} parent=11 // pred_check_branch
          %520 = sbr.rel (%p518) target = $region52
        $region51: #{tpu_custom_call.1} parent=11 // pred_region
          _
        $region52: #{tpu_custom_call.1} parent=11 // pred_fallthru
          _
        // Predicated region
        $region53: #{tpu_custom_call.1} parent=11 // pred_check
          %p521 = pneg %p315
        $region54: #{tpu_custom_call.1} parent=11 // pred_check_branch
          %523 = sbr.rel (%p521) target = $region56
        $region55: #{tpu_custom_call.1} parent=11 // pred_region
          _
        $region56: #{tpu_custom_call.1} parent=11 // pred_fallthru
          _
        // Predicated region
        $region57: #{tpu_custom_call.1} parent=11 // pred_check
          %p524 = pneg %p336
        $region58: #{tpu_custom_call.1} parent=11 // pred_check_branch
          %526 = sbr.rel (%p524) target = $region60
        $region59: #{tpu_custom_call.1} parent=11 // pred_region
          _
        $region60: #{tpu_custom_call.1} parent=11 // pred_fallthru
          _
        // Predicated region
        $region61: #{tpu_custom_call.1} parent=11 // pred_check
          %p527 = pneg %p357
        $region62: #{tpu_custom_call.1} parent=11 // pred_check_branch
          %529 = sbr.rel (%p527) target = $region64
        $region63: #{tpu_custom_call.1} parent=11 // pred_region
          _
        $region64: #{tpu_custom_call.1} parent=11 // pred_fallthru
          _
        // Predicated region
        $region65: #{tpu_custom_call.1} parent=11 // pred_check
          %p530 = pneg %p378
        $region66: #{tpu_custom_call.1} parent=11 // pred_check_branch
          %532 = sbr.rel (%p530) target = $region68
        $region67: #{tpu_custom_call.1} parent=11 // pred_region
          _
        $region68: #{tpu_custom_call.1} parent=11 // pred_fallthru
          _
        // Predicated region
        $region69: #{tpu_custom_call.1} parent=11 // pred_check
          %p533 = pneg %p399
        $region70: #{tpu_custom_call.1} parent=11 // pred_check_branch
          %535 = sbr.rel (%p533) target = $region72
        $region71: #{tpu_custom_call.1} parent=11 // pred_region
          _
        $region72: #{tpu_custom_call.1} parent=11 // pred_fallthru
          _
        // Predicated region
        $region73: #{tpu_custom_call.1} parent=11 // pred_check
          %p536 = pneg %p420
        $region74: #{tpu_custom_call.1} parent=11 // pred_check_branch
          %538 = sbr.rel (%p536) target = $region76
        $region75: #{tpu_custom_call.1} parent=11 // pred_region
          _
        $region76: #{tpu_custom_call.1} parent=11 // pred_fallthru
          _
        // Predicated region
        $region77: #{tpu_custom_call.1} parent=11 // pred_check
          %p539 = pneg %p441
        $region78: #{tpu_custom_call.1} parent=11 // pred_check_branch
          %541 = sbr.rel (%p539) target = $region80
        $region79: #{tpu_custom_call.1} parent=11 // pred_region
          _
        $region80: #{tpu_custom_call.1} parent=11 // pred_fallthru
          _
      $region12: #{tpu_custom_call.1} parent=5 // pred_fallthru
        _
      %p542 = scmp.lt.s32.totalorder %s32, 2
      // Predicated region
      $region81: #{tpu_custom_call.1} parent=5 // pred_check
        %p543 = pneg %p542
      $region82: #{tpu_custom_call.1} parent=5 // pred_check_branch
        %545 = sbr.rel (%p543) target = $region84
      $region83: #{tpu_custom_call.1} parent=5 // pred_region
        // Predicated region
        $region85: #{tpu_custom_call.1} parent=83 // pred_check
          %p546 = pneg %p52
        $region86: #{tpu_custom_call.1} parent=83 // pred_check_branch
          %548 = sbr.rel (%p546) target = $region88
        $region87: #{tpu_custom_call.1} parent=83 // pred_region
          %p549 = scmp.lt.s32.totalorder %s32, 1
          %s550 = scalar_select %p549, %s32, 1
          %s551 = smul.addr %s550, 8
          %s552 = scalar_lea.vmem %s0, %s551
        $region88: #{tpu_custom_call.1} parent=83 // pred_fallthru
          _
        // Predicated region
        $region89: #{tpu_custom_call.1} parent=83 // pred_check
          %p553 = pneg %p78
        $region90: #{tpu_custom_call.1} parent=83 // pred_check_branch
          %555 = sbr.rel (%p553) target = $region92
        $region91: #{tpu_custom_call.1} parent=83 // pred_region
          %s556 = sand.u32 %s68, 1
          %s557 = scalar_lea.sflag [#allocation3], %s556
          %s558 = sand.u32 %s68, 1
          %s559 = scalar_lea.vmem [#allocation2], %s558
          %561 = vsyncadd %s557, 0
          %s562 = scalar_lea.hbm %s1, %s32
          %s564 = sshll.u32 %s562, 4
          %s565 = int_to_ptr.hbm [resolvable:$true] %s564
          %s566 = sshll.u32 %s559, 4
          %s567 = int_to_ptr.vmem [resolvable:$true] %s566
          %569 = dma.hbm_to_vmem [thread:$0]  %s565, 16, %s567, %s557
        $region92: #{tpu_custom_call.1} parent=83 // pred_fallthru
          _
      $region84: #{tpu_custom_call.1} parent=5 // pred_fallthru
        _
      %p570 = scmp.le.s32.totalorder 1, %s32
      %p571 = scmp.lt.s32.totalorder %s32, 3
      %p572 = pnand %p570, %p571
      %p573 = pneg %p572
      // Predicated region
      $region93: #{tpu_custom_call.1} parent=5 // pred_check
        _
      $region94: #{tpu_custom_call.1} parent=5 // pred_check_branch
        %575 = sbr.rel (%p572) target = $region96
      $region95: #{tpu_custom_call.1} parent=5 // pred_region
        %s576 = ssub.s32 %s32, 1
        %s577 = sand.u32 %s71, 1
        %s578 = scalar_lea.sflag [#allocation3], %s577
        %s579 = sand.u32 %s71, 1
        %s580 = scalar_lea.vmem [#allocation2], %s579
        // Predicated region
        $region97: #{tpu_custom_call.1} parent=95 // pred_check
          %p581 = pneg %p84
        $region98: #{tpu_custom_call.1} parent=95 // pred_check_branch
          %583 = sbr.rel (%p581) target = $region100
        $region99: #{tpu_custom_call.1} parent=95 // pred_region
          %585 = dma.done %s578, 16
        $region100: #{tpu_custom_call.1} parent=95 // pred_fallthru
          _
        // Predicated region
        $region101: #{tpu_custom_call.1} parent=95 // pred_check
          %p586 = pneg %p126
        $region102: #{tpu_custom_call.1} parent=95 // pred_check_branch
          %588 = sbr.rel (%p586) target = $region104
        $region103: #{tpu_custom_call.1} parent=95 // pred_region
          %590 = dma.done [#allocation6], 16
        $region104: #{tpu_custom_call.1} parent=95 // pred_fallthru
          _
        %p591 = scmp.lt.s32.totalorder %s37, 1
        %s592 = scalar_select %p591, %s37, 1
        %s593 = smul.addr %s592, 8
        %s594 = scalar_lea.vmem %s0, %s593
        %p595 = pneg %p58
        %p596 = pneg %p55
        %s597 = sand.u32 %s71, 1
        %s598 = scalar_lea.sflag [#allocation3], %s597
        %s599 = sand.u32 %s71, 1
        %s600 = scalar_lea.vmem [#allocation2], %s599
        %p601 = pneg %p84
        %p602 = pneg %p81
        %p603 = pneg %p105
        %p604 = pneg %p102
        %p605 = pneg %p126
        %p606 = pneg %p123
        %p607 = pneg %p147
        %p608 = pneg %p144
        %p609 = pneg %p168
        %p610 = pneg %p165
        %p611 = pneg %p189
        %p612 = pneg %p186
        %p613 = pneg %p210
        %p614 = pneg %p207
        %p615 = pneg %p231
        %p616 = pneg %p228
        %p617 = pneg %p252
        %p618 = pneg %p249
        %p619 = pneg %p273
        %p620 = pneg %p270
        %p621 = pneg %p294
        %p622 = pneg %p291
        %p623 = pneg %p315
        %p624 = pneg %p312
        %p625 = pneg %p336
        %p626 = pneg %p333
        %p627 = pneg %p357
        %p628 = pneg %p354
        %p629 = pneg %p378
        %p630 = pneg %p375
        %p631 = pneg %p399
        %p632 = pneg %p396
        %p633 = pneg %p420
        %p634 = pneg %p417
        %p635 = pneg %p441
        %p636 = pneg %p438
        %p637 = pneg %p467
        %p638 = pneg %p464
        %s639 = sand.u32 %s454, 1
        %s640 = scalar_lea.sflag [#allocation4], %s639
        %s641 = sand.u32 %s454, 1
        %s642 = smul.addr %s641, 8
        %s643 = scalar_lea.vmem [#allocation7], %s642
        %p644 = scmp.lt.s32.totalorder %s37, 1
        %s645 = scalar_select %p644, %s37, 1
        %s646 = smul.addr %s645, 8
        %s647 = scalar_lea.vmem %s0, %s646
        %v649 = vld [vmem:[%s647] sm:$0xff]
        %v650 = vld [vmem:[%s2] sm:$0x1]
        %v651 = vld [vmem:[#allocation5] sm:$0x1]
        %vm652 = vcmask 261120
        %v653 = vsel %vm652, %v649, 0.0
        %654 = vadd.xlane.f32.xlu0 %v653
        %v655 = vpop.xlane.xlu0 %654
        %v656 = vrcp.pop 32.0
        %v657 = vmul.f32 32.0, %v656
        %v658 = vsub.f32 1.0, %v657
        %v659 = vmul.f32 %v656, %v658
        %v660 = vadd.f32 %v656, %v659
        %vm661 = vweird.f32 %v656
        %v662 = vsel %vm661, %v656, %v660
        %v663 = vmul.f32 %v655, %v662
        %v664 = vsub.f32 %v649, %v663
        %v665 = vmul.f32 %v664, %v664
        %v666 = vsel %vm652, %v665, 0.0
        %667 = vadd.xlane.f32.xlu0 %v666
        %v668 = vpop.xlane.xlu0 %667
        %v669 = vmul.f32 %v668, %v662
        %v670 = vadd.f32 %v669, 1e-05
        %v671 = vrsqrt.pop %v670
        %v672 = vmul.f32 %v671, %v670
        %v673 = vmul.f32 %v672, %v671
        %v674 = vmul.f32 0.5, %v673
        %v675 = vsub.f32 1.5, %v674
        %v676 = vmul.f32 %v671, %v675
        %vm677 = vweird.f32 %v670
        %vm678 = vweird.f32 %v671
        %vm679 = vmor %vm677, %vm678
        %v680 = vsel %vm679, %v671, %v676
        %v681 = vmul.f32 %v664, %v680
        %v683 = vperm.slane %v650, 0
        %v685 = vmul.f32 %v681, %v683
        %v687 = vperm.slane %v651, 0
        %v689 = vadd.f32 %v685, %v687
        %v690 = vpack.c.bf16 %v689, %v689
        %v691 = vld [vmem:[%s4] sm:$0xf]
        %v692 = vld [vmem:[%s4 + $0x4] sm:$0xf]
        %v693 = vld [vmem:[%s4 + $0x8] sm:$0xf]
        %v694 = vld [vmem:[%s4 + $0xc] sm:$0xf]
        %v695 = vld [vmem:[%s5] sm:$0x1]
        %v697 = vperm.slane %v695, 0
        %v703 = vunpack.c.l.b16 %v691
        %v704 = vunpack.c.l.b16 %v692
        %v705 = vunpack.c.l.b16 %v693
        %v706 = vunpack.c.l.b16 %v694
        %v707 = vpack.c.b16 %v704, %v703
        %v708 = vpack.c.b16 %v706, %v705
        %v712 = vsel %vm652, %v690, 0
        %714 = vmatpush.bf16.msra.mxu0 0
        %715 = vmatpush.bf16.msra.mxu0 0
        %716 = vmatpush.bf16.msra.mxu0 0
        %717 = vmatpush.bf16.msra.mxu0 0
        %718 = vmatpush.bf16.msra.mxu0 0
        %719 = vmatpush.bf16.msra.mxu0 0
        %720 = vmatpush.bf16.msra.mxu0 %v708
        %721 = vmatpush.bf16.msra.mxu0 %v707
        %722 = vmatmul.bf16.gmra.mxu0 %v712
        %v723 = vpop.f32.mrf.mxu0
        %v724 = vadd.f32 %v697, %v723
        %v725 = vpop.f32.mrf.mxu0
        %726 = vdwg.mxu0
        %v727 = vmul.f32 %v724, 0.35355338
        %729 = vrot.lane.b32.xlu0 %v727, 120
        %v730 = vpop.permute.xlu0 %729
        %732 = vrot.lane.b32.xlu0 %v727, 112
        %v733 = vpop.permute.xlu0 %732
        %735 = vrot.lane.b32.xlu0 %v727, 104
        %v736 = vpop.permute.xlu0 %735
        %v738 = vpack.c.bf16 %v727, %v727
        %v739 = vpack.c.bf16 %v730, %v730
        %v740 = vpack.c.bf16 %v733, %v733
        %v741 = vpack.c.bf16 %v736, %v736
        %743 = vrot.lane.b32.xlu0 %v724, 120
        %v744 = vpop.permute.xlu0 %743
        %746 = vrot.lane.b32.xlu0 %v724, 112
        %v747 = vpop.permute.xlu0 %746
        %749 = vrot.lane.b32.xlu0 %v724, 104
        %v750 = vpop.permute.xlu0 %749
        %v752 = vpack.c.bf16 %v724, %v724
        %v753 = vpack.c.bf16 %v744, %v744
        %v754 = vpack.c.bf16 %v747, %v747
        %v755 = vpack.c.bf16 %v750, %v750
        %v756 = vld [vmem:[%s580] sm:$0x1]
        %v758 = vperm.slane %v756, 0
        %v761 = vunpack.c.l.b16 %v752
        %v762 = vpack.c.b16 %v761, %v761
        %763 = vrot.lane.b32.xlu0 %v762, 96
        %v764 = vpop.permute.xlu0 %763
        %vm765 = vcmask 64512
        %v767 = vsel %vm765, %v738, 0
        %v770 = vsel %vm765, %v764, 0
        %772 = vmatpush.bf16.xpose.msra.mxu0 0
        %773 = vmatpush.bf16.xpose.msra.mxu0 0
        %774 = vmatpush.bf16.xpose.msra.mxu0 0
        %775 = vmatpush.bf16.xpose.msra.mxu0 0
        %776 = vmatpush.bf16.xpose.msra.mxu0 0
        %777 = vmatpush.bf16.xpose.msra.mxu0 0
        %778 = vmatpush.bf16.xpose.msra.mxu0 0
        %779 = vmatpush.bf16.xpose.msra.mxu0 %v770
        %780 = vmatmul.bf16.gmra.mxu0 %v767
        %v781 = vpop.f32.mrf.mxu0
        %v782 = vadd.f32 %v758, %v781
        %v783 = vpop.f32.mrf.mxu0
        %784 = vdwg.mxu0
        %v786 = vunpack.c.l.b16 %v753
        %v787 = vpack.c.b16 %v786, %v786
        %788 = vrot.lane.b32.xlu0 %v787, 96
        %v789 = vpop.permute.xlu0 %788
        %v791 = vsel %vm765, %v739, 0
        %v794 = vsel %vm765, %v789, 0
        %796 = vmatpush.bf16.xpose.msra.mxu0 0
        %797 = vmatpush.bf16.xpose.msra.mxu0 0
        %798 = vmatpush.bf16.xpose.msra.mxu0 0
        %799 = vmatpush.bf16.xpose.msra.mxu0 0
        %800 = vmatpush.bf16.xpose.msra.mxu0 0
        %801 = vmatpush.bf16.xpose.msra.mxu0 0
        %802 = vmatpush.bf16.xpose.msra.mxu0 0
        %803 = vmatpush.bf16.xpose.msra.mxu0 %v794
        %804 = vmatmul.bf16.gmra.mxu0 %v791
        %v805 = vpop.f32.mrf.mxu0
        %v806 = vadd.f32 %v758, %v805
        %v807 = vpop.f32.mrf.mxu0
        %808 = vdwg.mxu0
        %v810 = vunpack.c.l.b16 %v754
        %v811 = vpack.c.b16 %v810, %v810
        %812 = vrot.lane.b32.xlu0 %v811, 96
        %v813 = vpop.permute.xlu0 %812
        %v815 = vsel %vm765, %v740, 0
        %v818 = vsel %vm765, %v813, 0
        %820 = vmatpush.bf16.xpose.msra.mxu0 0
        %821 = vmatpush.bf16.xpose.msra.mxu0 0
        %822 = vmatpush.bf16.xpose.msra.mxu0 0
        %823 = vmatpush.bf16.xpose.msra.mxu0 0
        %824 = vmatpush.bf16.xpose.msra.mxu0 0
        %825 = vmatpush.bf16.xpose.msra.mxu0 0
        %826 = vmatpush.bf16.xpose.msra.mxu0 0
        %827 = vmatpush.bf16.xpose.msra.mxu0 %v818
        %828 = vmatmul.bf16.gmra.mxu0 %v815
        %v829 = vpop.f32.mrf.mxu0
        %v830 = vadd.f32 %v758, %v829
        %v831 = vpop.f32.mrf.mxu0
        %832 = vdwg.mxu0
        %v834 = vunpack.c.l.b16 %v755
        %v835 = vpack.c.b16 %v834, %v834
        %836 = vrot.lane.b32.xlu0 %v835, 96
        %v837 = vpop.permute.xlu0 %836
        %v839 = vsel %vm765, %v741, 0
        %v842 = vsel %vm765, %v837, 0
        %844 = vmatpush.bf16.xpose.msra.mxu0 0
        %845 = vmatpush.bf16.xpose.msra.mxu0 0
        %846 = vmatpush.bf16.xpose.msra.mxu0 0
        %847 = vmatpush.bf16.xpose.msra.mxu0 0
        %848 = vmatpush.bf16.xpose.msra.mxu0 0
        %849 = vmatpush.bf16.xpose.msra.mxu0 0
        %850 = vmatpush.bf16.xpose.msra.mxu0 0
        %851 = vmatpush.bf16.xpose.msra.mxu0 %v842
        %852 = vmatmul.bf16.gmra.mxu0 %v839
        %v853 = vpop.f32.mrf.mxu0
        %v854 = vadd.f32 %v758, %v853
        %v855 = vpop.f32.mrf.mxu0
        %856 = vdwg.mxu0
        %v857 = vsel %vm765, %v782, -inf
        %858 = vmax.xlane.f32.xlu0 %v857
        %v859 = vpop.xlane.xlu0 %858
        %v860 = vsel %vm765, %v806, -inf
        %861 = vmax.xlane.f32.xlu0 %v860
        %v862 = vpop.xlane.xlu0 %861
        %v863 = vsel %vm765, %v830, -inf
        %864 = vmax.xlane.f32.xlu0 %v863
        %v865 = vpop.xlane.xlu0 %864
        %v866 = vsel %vm765, %v854, -inf
        %867 = vmax.xlane.f32.xlu0 %v866
        %v868 = vpop.xlane.xlu0 %867
        %v869 = vsub.f32 %v782, %v859
        %v870 = vsub.f32 %v806, %v862
        %v871 = vsub.f32 %v830, %v865
        %v872 = vsub.f32 %v854, %v868
        %v873 = vmul.f32 %v869, 1.442695
        %v874 = vpow.pop %v873
        %v875 = vmul.f32 %v870, 1.442695
        %v876 = vpow.pop %v875
        %v877 = vmul.f32 %v871, 1.442695
        %v878 = vpow.pop %v877
        %v879 = vmul.f32 %v872, 1.442695
        %v880 = vpow.pop %v879
        %v881 = vsel %vm765, %v874, 0.0
        %882 = vadd.xlane.f32.xlu0 %v881
        %v883 = vpop.xlane.xlu0 %882
        %v884 = vsel %vm765, %v876, 0.0
        %885 = vadd.xlane.f32.xlu0 %v884
        %v886 = vpop.xlane.xlu0 %885
        %v887 = vsel %vm765, %v878, 0.0
        %888 = vadd.xlane.f32.xlu0 %v887
        %v889 = vpop.xlane.xlu0 %888
        %v890 = vsel %vm765, %v880, 0.0
        %891 = vadd.xlane.f32.xlu0 %v890
        %v892 = vpop.xlane.xlu0 %891
        %v893 = vrcp.pop %v883
        %v894 = vrcp.pop %v886
        %v895 = vrcp.pop %v889
        %v896 = vrcp.pop %v892
        %v897 = vmul.f32 %v874, %v893
        %v898 = vmul.f32 %v876, %v894
        %v899 = vmul.f32 %v878, %v895
        %v900 = vmul.f32 %v880, %v896
        %v901 = vpack.c.bf16 %v897, %v897
        %v902 = vpack.c.bf16 %v898, %v898
        %v903 = vpack.c.bf16 %v899, %v899
        %v904 = vpack.c.bf16 %v900, %v900
        %905 = vrot.lane.b32.xlu0 %v762, 64
        %v906 = vpop.permute.xlu0 %905
        %v908 = vsel %vm765, %v901, 0
        %vm910 = vcmask 1043456
        %v912 = vsel %vm910, %v906, 0
        %914 = vmatpush.bf16.msra.mxu0 0
        %915 = vmatpush.bf16.msra.mxu0 0
        %916 = vmatpush.bf16.msra.mxu0 0
        %917 = vmatpush.bf16.msra.mxu0 0
        %918 = vmatpush.bf16.msra.mxu0 0
        %919 = vmatpush.bf16.msra.mxu0 0
        %920 = vmatpush.bf16.msra.mxu0 0
        %921 = vmatpush.bf16.msra.mxu0 %v912
        %922 = vmatmul.bf16.gmra.mxu0 %v908
        %v923 = vpop.f32.mrf.mxu0
        %v924 = vadd.f32 0.0, %v923
        %v925 = vpop.f32.mrf.mxu0
        %926 = vdwg.mxu0
        %927 = vrot.lane.b32.xlu0 %v787, 64
        %v928 = vpop.permute.xlu0 %927
        %v930 = vsel %vm765, %v902, 0
        %v933 = vsel %vm910, %v928, 0
        %935 = vmatpush.bf16.msra.mxu0 0
        %936 = vmatpush.bf16.msra.mxu0 0
        %937 = vmatpush.bf16.msra.mxu0 0
        %938 = vmatpush.bf16.msra.mxu0 0
        %939 = vmatpush.bf16.msra.mxu0 0
        %940 = vmatpush.bf16.msra.mxu0 0
        %941 = vmatpush.bf16.msra.mxu0 0
        %942 = vmatpush.bf16.msra.mxu0 %v933
        %943 = vmatmul.bf16.gmra.mxu0 %v930
        %v944 = vpop.f32.mrf.mxu0
        %v945 = vadd.f32 0.0, %v944
        %v946 = vpop.f32.mrf.mxu0
        %947 = vdwg.mxu0
        %948 = vrot.lane.b32.xlu0 %v811, 64
        %v949 = vpop.permute.xlu0 %948
        %v951 = vsel %vm765, %v903, 0
        %v954 = vsel %vm910, %v949, 0
        %956 = vmatpush.bf16.msra.mxu0 0
        %957 = vmatpush.bf16.msra.mxu0 0
        %958 = vmatpush.bf16.msra.mxu0 0
        %959 = vmatpush.bf16.msra.mxu0 0
        %960 = vmatpush.bf16.msra.mxu0 0
        %961 = vmatpush.bf16.msra.mxu0 0
        %962 = vmatpush.bf16.msra.mxu0 0
        %963 = vmatpush.bf16.msra.mxu0 %v954
        %964 = vmatmul.bf16.gmra.mxu0 %v951
        %v965 = vpop.f32.mrf.mxu0
        %v966 = vadd.f32 0.0, %v965
        %v967 = vpop.f32.mrf.mxu0
        %968 = vdwg.mxu0
        %969 = vrot.lane.b32.xlu0 %v835, 64
        %v970 = vpop.permute.xlu0 %969
        %v972 = vsel %vm765, %v904, 0
        %v975 = vsel %vm910, %v970, 0
        %977 = vmatpush.bf16.msra.mxu0 0
        %978 = vmatpush.bf16.msra.mxu0 0
        %979 = vmatpush.bf16.msra.mxu0 0
        %980 = vmatpush.bf16.msra.mxu0 0
        %981 = vmatpush.bf16.msra.mxu0 0
        %982 = vmatpush.bf16.msra.mxu0 0
        %983 = vmatpush.bf16.msra.mxu0 0
        %984 = vmatpush.bf16.msra.mxu0 %v975
        %985 = vmatmul.bf16.gmra.mxu0 %v972
        %v986 = vpop.f32.mrf.mxu0
        %v987 = vadd.f32 0.0, %v986
        %v988 = vpop.f32.mrf.mxu0
        %989 = vdwg.mxu0
        %991 = vrot.lane.b32.xlu0 %v945, 8
        %v992 = vpop.permute.xlu0 %991
        %995 = vrot.lane.b32.xlu0 %v966, 16
        %v996 = vpop.permute.xlu0 %995
        %999 = vrot.lane.b32.xlu0 %v987, 24
        %v1000 = vpop.permute.xlu0 %999
        %v1002 = vsel %vm765, %v924, %v992
        %vm1003 = vcmask 130048
        %v1004 = vsel %vm1003, %v1002, %v996
        %vm1005 = vcmask 195584
        %v1006 = vsel %vm1005, %v1004, %v1000
        %v1007 = vpack.c.bf16 %v1006, %v1006
        %v1008 = vld [vmem:[%s6] sm:$0xf]
        %v1009 = vld [vmem:[%s6 + $0x4] sm:$0xf]
        %v1010 = vld [vmem:[%s6 + $0x8] sm:$0xf]
        %v1011 = vld [vmem:[%s6 + $0xc] sm:$0xf]
        %v1016 = vunpack.c.l.b16 %v1008
        %v1017 = vunpack.c.l.b16 %v1009
        %v1018 = vunpack.c.l.b16 %v1010
        %v1019 = vunpack.c.l.b16 %v1011
        %v1020 = vpack.c.b16 %v1017, %v1016
        %v1021 = vpack.c.b16 %v1019, %v1018
        %v1025 = vsel %vm652, %v1007, 0
        %1027 = vmatpush.bf16.msra.mxu0 0
        %1028 = vmatpush.bf16.msra.mxu0 0
        %1029 = vmatpush.bf16.msra.mxu0 0
        %1030 = vmatpush.bf16.msra.mxu0 0
        %1031 = vmatpush.bf16.msra.mxu0 0
        %1032 = vmatpush.bf16.msra.mxu0 0
        %1033 = vmatpush.bf16.msra.mxu0 %v1021
        %1034 = vmatpush.bf16.msra.mxu0 %v1020
        %1035 = vmatmul.bf16.gmra.mxu0 %v1025
        %v1036 = vpop.f32.mrf.mxu0
        %v1037 = vadd.f32 0.0, %v1036
        %v1038 = vpop.f32.mrf.mxu0
        %1039 = vdwg.mxu0
        %v1040 = vadd.f32 %v649, %v1037
        %v1041 = vld [vmem:[%s7] sm:$0x1]
        %v1043 = vperm.slane %v1041, 0
        %v1045 = vadd.f32 %v1040, %v1043
        %v1046 = vld [vmem:[%s8] sm:$0x1]
        %v1047 = vld [vmem:[%s9] sm:$0x1]
        %v1048 = vsel %vm652, %v1045, 0.0
        %1049 = vadd.xlane.f32.xlu0 %v1048
        %v1050 = vpop.xlane.xlu0 %1049
        %v1051 = vmul.f32 %v1050, %v662
        %v1052 = vsub.f32 %v1045, %v1051
        %v1053 = vmul.f32 %v1052, %v1052
        %v1054 = vsel %vm652, %v1053, 0.0
        %1055 = vadd.xlane.f32.xlu0 %v1054
        %v1056 = vpop.xlane.xlu0 %1055
        %v1057 = vmul.f32 %v1056, %v662
        %v1058 = vadd.f32 %v1057, 1e-05
        %v1059 = vrsqrt.pop %v1058
        %v1060 = vmul.f32 %v1059, %v1058
        %v1061 = vmul.f32 %v1060, %v1059
        %v1062 = vmul.f32 0.5, %v1061
        %v1063 = vsub.f32 1.5, %v1062
        %v1064 = vmul.f32 %v1059, %v1063
        %vm1065 = vweird.f32 %v1058
        %vm1066 = vweird.f32 %v1059
        %vm1067 = vmor %vm1065, %vm1066
        %v1068 = vsel %vm1067, %v1059, %v1064
        %v1069 = vmul.f32 %v1052, %v1068
        %v1071 = vperm.slane %v1046, 0
        %v1073 = vmul.f32 %v1069, %v1071
        %v1075 = vperm.slane %v1047, 0
        %v1077 = vadd.f32 %v1073, %v1075
        %v1078 = vpack.c.bf16 %v1077, %v1077
        %v1079 = vld [vmem:[%s10] sm:$0xf]
        %v1080 = vld [vmem:[%s10 + $0x4] sm:$0xf]
        %v1081 = vld [vmem:[%s10 + $0x8] sm:$0xf]
        %v1082 = vld [vmem:[%s10 + $0xc] sm:$0xf]
        %v1083 = vld [vmem:[%s11] sm:$0x1]
        %v1085 = vperm.slane %v1083, 0
        %v1091 = vunpack.c.l.b16 %v1079
        %v1092 = vunpack.c.l.b16 %v1080
        %v1093 = vunpack.c.l.b16 %v1081
        %v1094 = vunpack.c.l.b16 %v1082
        %v1095 = vpack.c.b16 %v1092, %v1091
        %v1096 = vpack.c.b16 %v1094, %v1093
        %v1100 = vsel %vm652, %v1078, 0
        %1102 = vmatpush.bf16.msra.mxu0 0
        %1103 = vmatpush.bf16.msra.mxu0 0
        %1104 = vmatpush.bf16.msra.mxu0 0
        %1105 = vmatpush.bf16.msra.mxu0 0
        %1106 = vmatpush.bf16.msra.mxu0 0
        %1107 = vmatpush.bf16.msra.mxu0 0
        %1108 = vmatpush.bf16.msra.mxu0 %v1096
        %1109 = vmatpush.bf16.msra.mxu0 %v1095
        %1110 = vmatmul.bf16.gmra.mxu0 %v1100
        %v1111 = vpop.f32.mrf.mxu0
        %v1112 = vadd.f32 %v1085, %v1111
        %v1113 = vpop.f32.mrf.mxu0
        %1114 = vdwg.mxu0
        %v1115 = vmax.f32 %v1112, 0.0
        %v1116 = vpack.c.bf16 %v1115, %v1115
        %v1117 = vld [vmem:[%s12] sm:$0xf]
        %v1118 = vld [vmem:[%s12 + $0x4] sm:$0xf]
        %v1119 = vld [vmem:[%s12 + $0x8] sm:$0xf]
        %v1120 = vld [vmem:[%s12 + $0xc] sm:$0xf]
        %v1121 = vld [vmem:[%s12 + $0x10] sm:$0xf]
        %v1122 = vld [vmem:[%s12 + $0x14] sm:$0xf]
        %v1123 = vld [vmem:[%s12 + $0x18] sm:$0xf]
        %v1124 = vld [vmem:[%s12 + $0x1c] sm:$0xf]
        %v1133 = vunpack.c.l.b16 %v1117
        %v1134 = vunpack.c.l.b16 %v1118
        %v1135 = vunpack.c.l.b16 %v1119
        %v1136 = vunpack.c.l.b16 %v1120
        %v1137 = vunpack.c.l.b16 %v1121
        %v1138 = vunpack.c.l.b16 %v1122
        %v1139 = vunpack.c.l.b16 %v1123
        %v1140 = vunpack.c.l.b16 %v1124
        %v1141 = vpack.c.b16 %v1134, %v1133
        %v1142 = vpack.c.b16 %v1136, %v1135
        %v1143 = vpack.c.b16 %v1138, %v1137
        %v1144 = vpack.c.b16 %v1140, %v1139
        %vm1149 = vcmask 523264
        %v1151 = vsel %vm1149, %v1116, 0
        %1153 = vmatpush.bf16.msra.mxu0 0
        %1154 = vmatpush.bf16.msra.mxu0 0
        %1155 = vmatpush.bf16.msra.mxu0 0
        %1156 = vmatpush.bf16.msra.mxu0 0
        %1157 = vmatpush.bf16.msra.mxu0 %v1144
        %1158 = vmatpush.bf16.msra.mxu0 %v1143
        %1159 = vmatpush.bf16.msra.mxu0 %v1142
        %1160 = vmatpush.bf16.msra.mxu0 %v1141
        %1161 = vmatmul.bf16.gmra.mxu0 %v1151
        %v1162 = vpop.f32.mrf.mxu0
        %v1163 = vadd.f32 0.0, %v1162
        %v1164 = vpop.f32.mrf.mxu0
        %1165 = vdwg.mxu0
        %v1166 = vadd.f32 %v1045, %v1163
        %v1167 = vld [vmem:[%s13] sm:$0x1]
        %v1169 = vperm.slane %v1167, 0
        %v1171 = vadd.f32 %v1166, %v1169
        %v1172 = vpack.c.bf16 %v1171, %v1171
        %v1173 = vld [vmem:[%s14] sm:$0xf]
        %v1174 = vld [vmem:[%s14 + $0x4] sm:$0xf]
        %v1175 = vld [vmem:[%s14 + $0x8] sm:$0xf]
        %v1176 = vld [vmem:[%s14 + $0xc] sm:$0xf]
        %v1177 = vld [vmem:[%s15] sm:$0x1]
        %v1179 = vperm.slane %v1177, 0
        %v1185 = vunpack.c.l.b16 %v1173
        %v1186 = vunpack.c.l.b16 %v1174
        %v1187 = vunpack.c.l.b16 %v1175
        %v1188 = vunpack.c.l.b16 %v1176
        %v1189 = vpack.c.b16 %v1186, %v1185
        %v1190 = vpack.c.b16 %v1188, %v1187
        %v1194 = vsel %vm652, %v1172, 0
        %1196 = vmatpush.bf16.msra.mxu0 0
        %1197 = vmatpush.bf16.msra.mxu0 0
        %1198 = vmatpush.bf16.msra.mxu0 0
        %1199 = vmatpush.bf16.msra.mxu0 0
        %1200 = vmatpush.bf16.msra.mxu0 0
        %1201 = vmatpush.bf16.msra.mxu0 0
        %1202 = vmatpush.bf16.msra.mxu0 %v1190
        %1203 = vmatpush.bf16.msra.mxu0 %v1189
        %1204 = vmatmul.bf16.gmra.mxu0 %v1194
        %v1205 = vpop.f32.mrf.mxu0
        %v1206 = vadd.f32 %v1179, %v1205
        %v1207 = vpop.f32.mrf.mxu0
        %1208 = vdwg.mxu0
        %v1209 = vmax.f32 %v1206, 0.0
        %v1210 = vpack.c.bf16 %v1209, %v1209
        %v1211 = vld [vmem:[%s16] sm:$0xf]
        %v1212 = vld [vmem:[%s16 + $0x4] sm:$0xf]
        %v1213 = vld [vmem:[%s16 + $0x8] sm:$0xf]
        %v1214 = vld [vmem:[%s16 + $0xc] sm:$0xf]
        %v1215 = vld [vmem:[%s16 + $0x10] sm:$0xf]
        %v1216 = vld [vmem:[%s16 + $0x14] sm:$0xf]
        %v1217 = vld [vmem:[%s16 + $0x18] sm:$0xf]
        %v1218 = vld [vmem:[%s16 + $0x1c] sm:$0xf]
        %v1219 = vld [vmem:[%s17] sm:$0x1]
        %v1221 = vperm.slane %v1219, 0
        %v1231 = vunpack.c.l.b16 %v1211
        %v1232 = vunpack.c.l.b16 %v1212
        %v1233 = vunpack.c.l.b16 %v1213
        %v1234 = vunpack.c.l.b16 %v1214
        %v1235 = vunpack.c.l.b16 %v1215
        %v1236 = vunpack.c.l.b16 %v1216
        %v1237 = vunpack.c.l.b16 %v1217
        %v1238 = vunpack.c.l.b16 %v1218
        %v1239 = vpack.c.b16 %v1232, %v1231
        %v1240 = vpack.c.b16 %v1234, %v1233
        %v1241 = vpack.c.b16 %v1236, %v1235
        %v1242 = vpack.c.b16 %v1238, %v1237
        %v1248 = vsel %vm1149, %v1210, 0
        %1250 = vmatpush.bf16.msra.mxu0 0
        %1251 = vmatpush.bf16.msra.mxu0 0
        %1252 = vmatpush.bf16.msra.mxu0 0
        %1253 = vmatpush.bf16.msra.mxu0 0
        %1254 = vmatpush.bf16.msra.mxu0 %v1242
        %1255 = vmatpush.bf16.msra.mxu0 %v1241
        %1256 = vmatpush.bf16.msra.mxu0 %v1240
        %1257 = vmatpush.bf16.msra.mxu0 %v1239
        %1258 = vmatmul.bf16.gmra.mxu0 %v1248
        %v1259 = vpop.f32.mrf.mxu0
        %v1260 = vadd.f32 %v1221, %v1259
        %v1261 = vpop.f32.mrf.mxu0
        %1262 = vdwg.mxu0
        %v1263 = vpack.c.bf16 %v1260, %v1260
        %v1264 = vld [vmem:[%s18] sm:$0xf]
        %v1265 = vld [vmem:[%s18 + $0x4] sm:$0xf]
        %v1266 = vld [vmem:[%s18 + $0x8] sm:$0xf]
        %v1267 = vld [vmem:[%s18 + $0xc] sm:$0xf]
        %v1272 = vunpack.c.l.b16 %v1264
        %v1273 = vunpack.c.l.b16 %v1265
        %v1274 = vunpack.c.l.b16 %v1266
        %v1275 = vunpack.c.l.b16 %v1267
        %v1276 = vpack.c.b16 %v1273, %v1272
        %v1277 = vpack.c.b16 %v1275, %v1274
        %v1281 = vsel %vm652, %v1263, 0
        %1283 = vmatpush.bf16.msra.mxu0 0
        %1284 = vmatpush.bf16.msra.mxu0 0
        %1285 = vmatpush.bf16.msra.mxu0 0
        %1286 = vmatpush.bf16.msra.mxu0 0
        %1287 = vmatpush.bf16.msra.mxu0 0
        %1288 = vmatpush.bf16.msra.mxu0 0
        %1289 = vmatpush.bf16.msra.mxu0 %v1277
        %1290 = vmatpush.bf16.msra.mxu0 %v1276
        %1291 = vmatmul.bf16.gmra.mxu0 %v1281
        %v1292 = vpop.f32.mrf.mxu0
        %v1293 = vadd.f32 0.0, %v1292
        %v1294 = vpop.f32.mrf.mxu0
        %1295 = vdwg.mxu0
        %1296 = vst [vmem:[%s643] sm:$0xff] %v1293
        %s1297 = sand.u32 %s454, 1
        %s1298 = scalar_lea.sflag [#allocation4], %s1297
        %s1299 = sand.u32 %s454, 1
        %s1300 = smul.addr %s1299, 8
        %s1301 = scalar_lea.vmem [#allocation7], %s1300
        // Predicated region
        $region105: #{tpu_custom_call.1} parent=95 // pred_check
          %p1302 = pneg %p464
        $region106: #{tpu_custom_call.1} parent=95 // pred_check_branch
          %1304 = sbr.rel (%p1302) target = $region108
        $region107: #{tpu_custom_call.1} parent=95 // pred_region
          %1306 = vsyncadd %s1298, 0
          %s1307 = smul.addr %s37, 8
          %s1308 = scalar_lea.hbm %s19, %s1307
          %s1310 = sshll.u32 %s1301, 4
          %s1311 = int_to_ptr.vmem [resolvable:$true] %s1310
          %s1312 = sshll.u32 %s1308, 4
          %s1313 = int_to_ptr.hbm [resolvable:$true] %s1312
          %1315 = dma.vmem_to_hbm [thread:$0]  %s1311, 128, %s1313, %s1298
        $region108: #{tpu_custom_call.1} parent=95 // pred_fallthru
          _
      $region96: #{tpu_custom_call.1} parent=5 // pred_fallthru
        _
      %p1316 = scmp.le.s32.totalorder 2, %s32
      // Predicated region
      $region109: #{tpu_custom_call.1} parent=5 // pred_check
        %p1317 = pneg %p1316
      $region110: #{tpu_custom_call.1} parent=5 // pred_check_branch
        %1319 = sbr.rel (%p1317) target = $region112
      $region111: #{tpu_custom_call.1} parent=5 // pred_region
        %s1320 = ssub.s32 %s32, 2
        // Predicated region
        $region113: #{tpu_custom_call.1} parent=111 // pred_check
          %p1321 = pneg %p470
        $region114: #{tpu_custom_call.1} parent=111 // pred_check_branch
          %1323 = sbr.rel (%p1321) target = $region116
        $region115: #{tpu_custom_call.1} parent=111 // pred_region
          %s1324 = sand.u32 %s455, 1
          %s1325 = scalar_lea.sflag [#allocation4], %s1324
          %s1326 = sand.u32 %s455, 1
          %s1327 = smul.addr %s1326, 8
          %s1328 = scalar_lea.vmem [#allocation7], %s1327
          %1330 = dma.done %s1325, 128
        $region116: #{tpu_custom_call.1} parent=111 // pred_fallthru
          _
      $region112: #{tpu_custom_call.1} parent=5 // pred_fallthru
        _
    $region6: #{tpu_custom_call.1} parent=1 // loop_footer
      %s36 = sadd.s32 1, %s32
    $region7: #{tpu_custom_call.1} parent=1 // loop_footer_branch
      %31 = sbr.rel target = $region3
    $region8: #{tpu_custom_call.1} parent=1 // loop_exit
      _
    %1331 = vsyncpa [#allocation3], 1
    %s1332 = scalar_lea.sflag [#allocation3], 1
    %1333 = vsyncpa %s1332, 1
    %1334 = vsyncpa [#allocation6], 1
    %1335 = vsyncpa [#allocation4], 1
    %s1336 = scalar_lea.sflag [#allocation4], 1
    %1337 = vsyncpa %s1336, 1

</llo_original>
